<compile_context>
chip_gen: v7x
topology: tpu7x:2x2x1
jax: 0.10.0
libtpu: 0.0.40
codegen_flags: <defaults>
</compile_context>

<pallas_src>
import functools

import jax
import jax.numpy as jnp
from jax import lax
from jax.experimental import pallas as pl
from jax.experimental.pallas import tpu as pltpu


def _round_up(x, m):
    return ((x + m - 1) // m) * m


# ------------- fused RHN + tied-decoder kernel (single invocation) ------------

def _make_fused_kernel(S, B, H, Tp, nlayers, rec_depth):
    """Whole forward pass in one kernel: recurrence + per-step decoder matmul.

    Seed semantics (chosen by the wrapper, faithful to the PyTorch loop):
      * rec_depth == 1 or S == 1 : seed = emb[0]; step 0 applies the layer stack
        rec_depth times when S == 1, once when rec_depth == 1.
      * rec_depth > 1 and S > 1  : seed = ORIGINAL hidden[-1]; the depth-0 pass
        on emb[0] is dead in the reference (overwritten before being read), so
        it is not emitted at all.
    Steps 1..S-1 read the already-final hidden[t-1], so the rec_depth repeats
    are identical and a single application per step is exact.
    """
    n0 = rec_depth if S == 1 else 1   # layer-stack applications at t == 0

    def kernel(seed_ref, w_ref, b_ref, dw_ref, db_ref, hid_ref, dec_ref):

        def apply_layers(h):
            # h: (B, H) f32; one (B,H)@(H,2H) bf16 MXU matmul per layer
            # (plain | transform fused), f32 epilogue.
            for l in range(nlayers):
                z = jnp.dot(h.astype(jnp.bfloat16), w_ref[l],
                            preferred_element_type=jnp.float32) + b_ref[l]
                plain = jnp.maximum(z[:, :H], 0.0)                     # relu branch
                logits = z[:, H:]                                      # gate branch
                logits = logits - jnp.max(logits, axis=-1, keepdims=True)
                e = jnp.exp(logits)
                gate = e / jnp.sum(e, axis=-1, keepdims=True)          # exact (feeds back through recurrence)
                h = (1.0 - gate) * h + plain * gate                    # carry + transform
            return h

        def emit(t, h):
            hid_ref[t] = h
            dec_ref[t] = jnp.dot(h.astype(jnp.bfloat16), dw_ref[...],
                                 preferred_element_type=jnp.float32) + db_ref[...]

        # ---- step 0 (explicit trace-time structure; no dead MXU work) ----
        h = seed_ref[...]
        for _ in range(n0):
            h = apply_layers(h)
        emit(0, h)

        # ---- steps 1..S-1: one application each (depth repeats are identical) ----
        if S > 1:
            def body(t, h):
                h = apply_layers(h)
                emit(t, h)
                return h
            lax.fori_loop(1, S, body, h, unroll=True)

    return kernel


# ------------------------------- forward --------------------------------------

def language_model_forward(tokens, hidden, enc_w, w_cat_bf16, b_cat,
                           dec_w_pad, dec_b_pad, *, rec_depth, ntoken):
    """tokens (S,B) int32, hidden (S,B,H) f32 -> (decoded (S,B,ntoken), hidden (S,B,H))."""
    S, B = tokens.shape
    H = enc_w.shape[1]
    nlayers = w_cat_bf16.shape[0]
    Tp = dec_w_pad.shape[1]

    # nn.Dropout == identity (eval mode).
    if rec_depth == 1 or S == 1:
        seed = jnp.take(enc_w, tokens[0], axis=0)   # emb[0]: the only embedding row ever read
    else:
        seed = hidden[-1]                           # reference quirk: original last state seeds step 0

    hid_out, dec_pad = pl.pallas_call(
        _make_fused_kernel(S, B, H, Tp, nlayers, rec_depth),
        out_shape=(jax.ShapeDtypeStruct((S, B, H), jnp.float32),
                   jax.ShapeDtypeStruct((S, B, Tp), jnp.float32)),
        in_specs=[pl.BlockSpec(memory_space=pltpu.MemorySpace.VMEM)] * 5,
        out_specs=(pl.BlockSpec(memory_space=pltpu.MemorySpace.VMEM),
                   pl.BlockSpec(memory_space=pltpu.MemorySpace.VMEM)),
    )(seed, w_cat_bf16, b_cat, dec_w_pad, dec_b_pad)

    decoded = dec_pad if Tp == ntoken else dec_pad[:, :, :ntoken]
    return decoded, hid_out


# ------------------------------ parameters ------------------------------------

def init_params(key, ntoken, ninp, nlayers):
    """f32 parameters mirroring the PyTorch initialization."""
    keys = jax.random.split(key, 1 + 2 * nlayers)
    # encoder.weight.uniform_(-0.1, 0.1); decoder.weight tied to it
    enc_w = jax.random.uniform(keys[0], (ntoken, ninp), jnp.float32, -0.1, 0.1)
    bound = 1.0 / (ninp ** 0.5)
    w_list, b_list = [], []
    for l in range(nlayers):
        kp, kt = keys[1 + 2 * l], keys[2 + 2 * l]
        wp = jax.random.uniform(kp, (ninp, ninp), jnp.float32, -bound, bound)   # (in, out)
        bp = jax.random.uniform(jax.random.fold_in(kp, 1), (1, ninp), jnp.float32,
                                -bound, bound)
        wt = jax.random.uniform(kt, (ninp, ninp), jnp.float32, -bound, bound)   # (in, out)
        bt = jnp.full((1, ninp), -1.0, jnp.float32)          # transform_layer.bias.fill_(-1)
        w_list.append(jnp.concatenate([wp, wt], axis=1))     # (ninp, 2*ninp)  plain|transform
        b_list.append(jnp.concatenate([bp, bt], axis=1))     # (1, 2*ninp)
    w_cat = jnp.stack(w_list, axis=0)                        # (nlayers, ninp, 2*ninp)
    b_cat = jnp.stack(b_list, axis=0)                        # (nlayers, 1, 2*ninp)
    dec_b = jnp.zeros((1, ntoken), jnp.float32)              # decoder.bias.fill_(0)
    return enc_w, w_cat, b_cat, dec_b


def prepare_kernel_params(enc_w, w_cat, dec_b):
    """One-time (init-time) kernel-side prep: bf16 casts, tied-decoder transpose, vocab pad."""
    ntoken, _ = enc_w.shape
    Tp = _round_up(ntoken, 128)                              # lane-dense logits
    dec_w_pad = jnp.pad(enc_w.T, ((0, 0), (0, Tp - ntoken))).astype(jnp.bfloat16)
    dec_b_pad = jnp.pad(dec_b, ((0, 0), (0, Tp - ntoken)))
    return w_cat.astype(jnp.bfloat16), dec_w_pad, dec_b_pad


# --------------------------- pure-JAX reference --------------------------------

def _reference_forward(tokens, hidden, enc_w, w_cat, b_cat, dec_b, rec_depth):
    """Mirrors the PyTorch loop exactly (f32), for the numerical sanity check."""
    S, B = tokens.shape
    H = enc_w.shape[1]
    nlayers = w_cat.shape[0]
    emb = jnp.take(enc_w, tokens, axis=0)
    hid = [hidden[i] for i in range(S)]
    i = 0
    cur_depth = 0
    for idx in range(S):
        x = emb[idx]
        for _ in range(rec_depth):
            h = x if (i == 0 and cur_depth == 0) else hid[i - 1]
            for l in range(nlayers):
                plain = jax.nn.relu(h @ w_cat[l, :, :H] + b_cat[l, :, :H])
                gate = jax.nn.softmax(h @ w_cat[l, :, H:] + b_cat[l, :, H:], axis=-1)
                h = (1.0 - gate) * h + plain * gate
            hid[i] = h
            cur_depth += 1
        i += 1
    out = jnp.stack(hid, axis=0)
    decoded = out.reshape(S * B, H) @ enc_w.T + dec_b
    return decoded.reshape(S, B, -1), out


# ---------------------------------- main ---------------------------------------

if __name__ == "__main__":
    # weight tying requires nhid == ninp; sizes lane/sublane aligned
    # (H and vocab multiples of 128, batch multiple of 8) so every tile is vreg-dense.
    ntoken, ninp, nhid = 256, 128, 128
    nlayers = 2
    seq_len, batch = 4, 8

    key = jax.random.PRNGKey(0)
    k_par, k_tok, k_hid = jax.random.split(key, 3)

    enc_w, w_cat, b_cat, dec_b = init_params(k_par, ntoken, ninp, nlayers)
    # hoisted one-time prep (no per-call casts / padding)
    w_cat_bf16, dec_w_pad, dec_b_pad = prepare_kernel_params(enc_w, w_cat, dec_b)

    tokens = jax.random.randint(k_tok, (seq_len, batch), 0, ntoken, dtype=jnp.int32)
    hidden = 0.1 * jax.random.normal(k_hid, (seq_len, batch, nhid), jnp.float32)

    # (rec_depth, S) configs: main demo + paths that exercise the emb[0] seed and
    # the repeated-depth (S == 1) structure.
    configs = [(2, seq_len), (1, seq_len), (3, 1)]
    for rec_depth, S in configs:
        tok = tokens[:S]
        hid_in = hidden[:S]
        fwd = jax.jit(functools.partial(language_model_forward,
                                        rec_depth=rec_depth, ntoken=ntoken))
        decoded, new_hidden = fwd(tok, hid_in, enc_w, w_cat_bf16, b_cat,
                                  dec_w_pad, dec_b_pad)
        jax.block_until_ready((decoded, new_hidden))

        assert decoded.shape == (S, batch, ntoken)
        assert new_hidden.shape == (S, batch, nhid)

        # numerical sanity check vs. the f32 pure-JAX reference (bf16 MXU matmuls)
        ref_decoded, ref_hidden = _reference_forward(
            tok, hid_in, enc_w, w_cat, b_cat, dec_b, rec_depth)
        assert jnp.allclose(new_hidden, ref_hidden, atol=2e-2), \
            f"hidden mismatch (rec_depth={rec_depth}, S={S})"
        assert jnp.allclose(decoded, ref_decoded, atol=2e-2), \
            f"decoded mismatch (rec_depth={rec_depth}, S={S})"

    print("KERNEL_OK")
</pallas_src>

<mosaic_0001>
module attributes {stable_mosaic.version = 11 : i64} {
  func.func @kernel(%arg0: memref<8x128xf32, #tpu.memory_space<vmem>>, %arg1: memref<2x128x256xbf16, #tpu.memory_space<vmem>>, %arg2: memref<2x1x256xf32, #tpu.memory_space<vmem>>, %arg3: memref<128x256xbf16, #tpu.memory_space<vmem>>, %arg4: memref<1x256xf32, #tpu.memory_space<vmem>>, %arg5: memref<4x8x128xf32, #tpu.memory_space<vmem>>, %arg6: memref<4x8x256xf32, #tpu.memory_space<vmem>>) attributes {dimension_semantics = [], scalar_prefetch = 0 : i64, scratch_operands = 0 : i64, tpu.core_type = #tpu.core_type<tc>} {
    %c0 = arith.constant 0 : index
    %c0_0 = arith.constant 0 : index
    %0 = vector.load %arg0[%c0, %c0_0] : memref<8x128xf32, #tpu.memory_space<vmem>>, vector<8x128xf32>
    %1 = arith.truncf %0 : vector<8x128xf32> to vector<8x128xbf16>
    %c0_1 = arith.constant 0 : index
    %c0_2 = arith.constant 0 : index
    %c0_3 = arith.constant 0 : index
    %2 = vector.load %arg1[%c0_1, %c0_2, %c0_3] : memref<2x128x256xbf16, #tpu.memory_space<vmem>>, vector<1x128x256xbf16>
    %3 = vector.shape_cast %2 : vector<1x128x256xbf16> to vector<128x256xbf16>
    %cst = arith.constant dense<0.000000e+00> : vector<8x256xf32>
    %4 = tpu.matmul %1, %3, %cst {dimension_numbers = #tpu.dot_dimension_numbers<[1], [0], [0], [1], [0, 0, 1, 1], [], []>} : vector<8x128xbf16>, vector<128x256xbf16>, vector<8x256xf32> -> vector<8x256xf32>
    %c0_4 = arith.constant 0 : index
    %c0_5 = arith.constant 0 : index
    %c0_6 = arith.constant 0 : index
    %5 = vector.load %arg2[%c0_4, %c0_5, %c0_6] : memref<2x1x256xf32, #tpu.memory_space<vmem>>, vector<1x1x256xf32>
    %6 = vector.shape_cast %5 : vector<1x1x256xf32> to vector<1x256xf32>
    %7 = vector.broadcast %6 : vector<1x256xf32> to vector<8x256xf32>
    %8 = arith.addf %4, %7 : vector<8x256xf32>
    %9 = vector.extract_strided_slice %8 {offsets = [0, 0], sizes = [8, 128], strides = [1, 1]} : vector<8x256xf32> to vector<8x128xf32>
    %cst_7 = arith.constant 0.000000e+00 : f32
    %10 = vector.broadcast %cst_7 : f32 to vector<8x128xf32>
    %11 = arith.maximumf %9, %10 : vector<8x128xf32>
    %12 = vector.extract_strided_slice %8 {offsets = [0, 128], sizes = [8, 128], strides = [1, 1]} : vector<8x256xf32> to vector<8x128xf32>
    %cst_8 = arith.constant dense<0xFF800000> : vector<8xf32>
    %13 = vector.multi_reduction <maximumf>, %12, %cst_8 [1] : vector<8x128xf32> to vector<8xf32>
    %14 = vector.shape_cast %13 : vector<8xf32> to vector<8x1xf32>
    %15 = vector.broadcast %14 : vector<8x1xf32> to vector<8x128xf32>
    %16 = arith.subf %12, %15 : vector<8x128xf32>
    %17 = math.exp %16 : vector<8x128xf32>
    %cst_9 = arith.constant dense<0.000000e+00> : vector<8xf32>
    %18 = vector.multi_reduction <add>, %17, %cst_9 [1] : vector<8x128xf32> to vector<8xf32>
    %19 = vector.shape_cast %18 : vector<8xf32> to vector<8x1xf32>
    %20 = vector.broadcast %19 : vector<8x1xf32> to vector<8x128xf32>
    %21 = arith.divf %17, %20 : vector<8x128xf32>
    %cst_10 = arith.constant 1.000000e+00 : f32
    %22 = vector.broadcast %cst_10 : f32 to vector<8x128xf32>
    %23 = arith.subf %22, %21 : vector<8x128xf32>
    %24 = arith.mulf %23, %0 : vector<8x128xf32>
    %25 = arith.mulf %11, %21 : vector<8x128xf32>
    %26 = arith.addf %24, %25 : vector<8x128xf32>
    %27 = arith.truncf %26 : vector<8x128xf32> to vector<8x128xbf16>
    %c1 = arith.constant 1 : index
    %c0_11 = arith.constant 0 : index
    %c0_12 = arith.constant 0 : index
    %28 = vector.load %arg1[%c1, %c0_11, %c0_12] : memref<2x128x256xbf16, #tpu.memory_space<vmem>>, vector<1x128x256xbf16>
    %29 = vector.shape_cast %28 : vector<1x128x256xbf16> to vector<128x256xbf16>
    %cst_13 = arith.constant dense<0.000000e+00> : vector<8x256xf32>
    %30 = tpu.matmul %27, %29, %cst_13 {dimension_numbers = #tpu.dot_dimension_numbers<[1], [0], [0], [1], [0, 0, 1, 1], [], []>} : vector<8x128xbf16>, vector<128x256xbf16>, vector<8x256xf32> -> vector<8x256xf32>
    %c1_14 = arith.constant 1 : index
    %c0_15 = arith.constant 0 : index
    %c0_16 = arith.constant 0 : index
    %31 = vector.load %arg2[%c1_14, %c0_15, %c0_16] : memref<2x1x256xf32, #tpu.memory_space<vmem>>, vector<1x1x256xf32>
    %32 = vector.shape_cast %31 : vector<1x1x256xf32> to vector<1x256xf32>
    %33 = vector.broadcast %32 : vector<1x256xf32> to vector<8x256xf32>
    %34 = arith.addf %30, %33 : vector<8x256xf32>
    %35 = vector.extract_strided_slice %34 {offsets = [0, 0], sizes = [8, 128], strides = [1, 1]} : vector<8x256xf32> to vector<8x128xf32>
    %cst_17 = arith.constant 0.000000e+00 : f32
    %36 = vector.broadcast %cst_17 : f32 to vector<8x128xf32>
    %37 = arith.maximumf %35, %36 : vector<8x128xf32>
    %38 = vector.extract_strided_slice %34 {offsets = [0, 128], sizes = [8, 128], strides = [1, 1]} : vector<8x256xf32> to vector<8x128xf32>
    %cst_18 = arith.constant dense<0xFF800000> : vector<8xf32>
    %39 = vector.multi_reduction <maximumf>, %38, %cst_18 [1] : vector<8x128xf32> to vector<8xf32>
    %40 = vector.shape_cast %39 : vector<8xf32> to vector<8x1xf32>
    %41 = vector.broadcast %40 : vector<8x1xf32> to vector<8x128xf32>
    %42 = arith.subf %38, %41 : vector<8x128xf32>
    %43 = math.exp %42 : vector<8x128xf32>
    %cst_19 = arith.constant dense<0.000000e+00> : vector<8xf32>
    %44 = vector.multi_reduction <add>, %43, %cst_19 [1] : vector<8x128xf32> to vector<8xf32>
    %45 = vector.shape_cast %44 : vector<8xf32> to vector<8x1xf32>
    %46 = vector.broadcast %45 : vector<8x1xf32> to vector<8x128xf32>
    %47 = arith.divf %43, %46 : vector<8x128xf32>
    %cst_20 = arith.constant 1.000000e+00 : f32
    %48 = vector.broadcast %cst_20 : f32 to vector<8x128xf32>
    %49 = arith.subf %48, %47 : vector<8x128xf32>
    %50 = arith.mulf %49, %26 : vector<8x128xf32>
    %51 = arith.mulf %37, %47 : vector<8x128xf32>
    %52 = arith.addf %50, %51 : vector<8x128xf32>
    %c0_21 = arith.constant 0 : index
    %c0_22 = arith.constant 0 : index
    %c0_23 = arith.constant 0 : index
    %53 = vector.load %arg5[%c0_21, %c0_22, %c0_23] : memref<4x8x128xf32, #tpu.memory_space<vmem>>, vector<1x8x128xf32>
    %54 = vector.shape_cast %53 : vector<1x8x128xf32> to vector<8x128xf32>
    %55 = vector.shape_cast %52 : vector<8x128xf32> to vector<1x8x128xf32>
    tpu.vector_store %arg5[%c0_21, %c0_22, %c0_23], %55 {strides = array<i32>} : memref<4x8x128xf32, #tpu.memory_space<vmem>>, vector<1x8x128xf32>,
    %56 = arith.truncf %52 : vector<8x128xf32> to vector<8x128xbf16>
    %c0_24 = arith.constant 0 : index
    %c0_25 = arith.constant 0 : index
    %57 = vector.load %arg3[%c0_24, %c0_25] : memref<128x256xbf16, #tpu.memory_space<vmem>>, vector<128x256xbf16>
    %cst_26 = arith.constant dense<0.000000e+00> : vector<8x256xf32>
    %58 = tpu.matmul %56, %57, %cst_26 {dimension_numbers = #tpu.dot_dimension_numbers<[1], [0], [0], [1], [0, 0, 1, 1], [], []>} : vector<8x128xbf16>, vector<128x256xbf16>, vector<8x256xf32> -> vector<8x256xf32>
    %c0_27 = arith.constant 0 : index
    %c0_28 = arith.constant 0 : index
    %59 = vector.load %arg4[%c0_27, %c0_28] : memref<1x256xf32, #tpu.memory_space<vmem>>, vector<1x256xf32>
    %60 = vector.broadcast %59 : vector<1x256xf32> to vector<8x256xf32>
    %61 = arith.addf %58, %60 : vector<8x256xf32>
    %c0_29 = arith.constant 0 : index
    %c0_30 = arith.constant 0 : index
    %c0_31 = arith.constant 0 : index
    %62 = vector.load %arg6[%c0_29, %c0_30, %c0_31] : memref<4x8x256xf32, #tpu.memory_space<vmem>>, vector<1x8x256xf32>
    %63 = vector.shape_cast %62 : vector<1x8x256xf32> to vector<8x256xf32>
    %64 = vector.shape_cast %61 : vector<8x256xf32> to vector<1x8x256xf32>
    tpu.vector_store %arg6[%c0_29, %c0_30, %c0_31], %64 {strides = array<i32>} : memref<4x8x256xf32, #tpu.memory_space<vmem>>, vector<1x8x256xf32>,
    %c1_i32 = arith.constant 1 : i32
    %65 = arith.truncf %52 : vector<8x128xf32> to vector<8x128xbf16>
    %c0_32 = arith.constant 0 : index
    %c0_33 = arith.constant 0 : index
    %c0_34 = arith.constant 0 : index
    %66 = vector.load %arg1[%c0_32, %c0_33, %c0_34] : memref<2x128x256xbf16, #tpu.memory_space<vmem>>, vector<1x128x256xbf16>
    %67 = vector.shape_cast %66 : vector<1x128x256xbf16> to vector<128x256xbf16>
    %cst_35 = arith.constant dense<0.000000e+00> : vector<8x256xf32>
    %68 = tpu.matmul %65, %67, %cst_35 {dimension_numbers = #tpu.dot_dimension_numbers<[1], [0], [0], [1], [0, 0, 1, 1], [], []>} : vector<8x128xbf16>, vector<128x256xbf16>, vector<8x256xf32> -> vector<8x256xf32>
    %c0_36 = arith.constant 0 : index
    %c0_37 = arith.constant 0 : index
    %c0_38 = arith.constant 0 : index
    %69 = vector.load %arg2[%c0_36, %c0_37, %c0_38] : memref<2x1x256xf32, #tpu.memory_space<vmem>>, vector<1x1x256xf32>
    %70 = vector.shape_cast %69 : vector<1x1x256xf32> to vector<1x256xf32>
    %71 = vector.broadcast %70 : vector<1x256xf32> to vector<8x256xf32>
    %72 = arith.addf %68, %71 : vector<8x256xf32>
    %73 = vector.extract_strided_slice %72 {offsets = [0, 0], sizes = [8, 128], strides = [1, 1]} : vector<8x256xf32> to vector<8x128xf32>
    %cst_39 = arith.constant 0.000000e+00 : f32
    %74 = vector.broadcast %cst_39 : f32 to vector<8x128xf32>
    %75 = arith.maximumf %73, %74 : vector<8x128xf32>
    %76 = vector.extract_strided_slice %72 {offsets = [0, 128], sizes = [8, 128], strides = [1, 1]} : vector<8x256xf32> to vector<8x128xf32>
    %cst_40 = arith.constant dense<0xFF800000> : vector<8xf32>
    %77 = vector.multi_reduction <maximumf>, %76, %cst_40 [1] : vector<8x128xf32> to vector<8xf32>
    %78 = vector.shape_cast %77 : vector<8xf32> to vector<8x1xf32>
    %79 = vector.broadcast %78 : vector<8x1xf32> to vector<8x128xf32>
    %80 = arith.subf %76, %79 : vector<8x128xf32>
    %81 = math.exp %80 : vector<8x128xf32>
    %cst_41 = arith.constant dense<0.000000e+00> : vector<8xf32>
    %82 = vector.multi_reduction <add>, %81, %cst_41 [1] : vector<8x128xf32> to vector<8xf32>
    %83 = vector.shape_cast %82 : vector<8xf32> to vector<8x1xf32>
    %84 = vector.broadcast %83 : vector<8x1xf32> to vector<8x128xf32>
    %85 = arith.divf %81, %84 : vector<8x128xf32>
    %cst_42 = arith.constant 1.000000e+00 : f32
    %86 = vector.broadcast %cst_42 : f32 to vector<8x128xf32>
    %87 = arith.subf %86, %85 : vector<8x128xf32>
    %88 = arith.mulf %87, %52 : vector<8x128xf32>
    %89 = arith.mulf %75, %85 : vector<8x128xf32>
    %90 = arith.addf %88, %89 : vector<8x128xf32>
    %91 = arith.truncf %90 : vector<8x128xf32> to vector<8x128xbf16>
    %c1_43 = arith.constant 1 : index
    %c0_44 = arith.constant 0 : index
    %c0_45 = arith.constant 0 : index
    %92 = vector.load %arg1[%c1_43, %c0_44, %c0_45] : memref<2x128x256xbf16, #tpu.memory_space<vmem>>, vector<1x128x256xbf16>
    %93 = vector.shape_cast %92 : vector<1x128x256xbf16> to vector<128x256xbf16>
    %cst_46 = arith.constant dense<0.000000e+00> : vector<8x256xf32>
    %94 = tpu.matmul %91, %93, %cst_46 {dimension_numbers = #tpu.dot_dimension_numbers<[1], [0], [0], [1], [0, 0, 1, 1], [], []>} : vector<8x128xbf16>, vector<128x256xbf16>, vector<8x256xf32> -> vector<8x256xf32>
    %c1_47 = arith.constant 1 : index
    %c0_48 = arith.constant 0 : index
    %c0_49 = arith.constant 0 : index
    %95 = vector.load %arg2[%c1_47, %c0_48, %c0_49] : memref<2x1x256xf32, #tpu.memory_space<vmem>>, vector<1x1x256xf32>
    %96 = vector.shape_cast %95 : vector<1x1x256xf32> to vector<1x256xf32>
    %97 = vector.broadcast %96 : vector<1x256xf32> to vector<8x256xf32>
    %98 = arith.addf %94, %97 : vector<8x256xf32>
    %99 = vector.extract_strided_slice %98 {offsets = [0, 0], sizes = [8, 128], strides = [1, 1]} : vector<8x256xf32> to vector<8x128xf32>
    %cst_50 = arith.constant 0.000000e+00 : f32
    %100 = vector.broadcast %cst_50 : f32 to vector<8x128xf32>
    %101 = arith.maximumf %99, %100 : vector<8x128xf32>
    %102 = vector.extract_strided_slice %98 {offsets = [0, 128], sizes = [8, 128], strides = [1, 1]} : vector<8x256xf32> to vector<8x128xf32>
    %cst_51 = arith.constant dense<0xFF800000> : vector<8xf32>
    %103 = vector.multi_reduction <maximumf>, %102, %cst_51 [1] : vector<8x128xf32> to vector<8xf32>
    %104 = vector.shape_cast %103 : vector<8xf32> to vector<8x1xf32>
    %105 = vector.broadcast %104 : vector<8x1xf32> to vector<8x128xf32>
    %106 = arith.subf %102, %105 : vector<8x128xf32>
    %107 = math.exp %106 : vector<8x128xf32>
    %cst_52 = arith.constant dense<0.000000e+00> : vector<8xf32>
    %108 = vector.multi_reduction <add>, %107, %cst_52 [1] : vector<8x128xf32> to vector<8xf32>
    %109 = vector.shape_cast %108 : vector<8xf32> to vector<8x1xf32>
    %110 = vector.broadcast %109 : vector<8x1xf32> to vector<8x128xf32>
    %111 = arith.divf %107, %110 : vector<8x128xf32>
    %cst_53 = arith.constant 1.000000e+00 : f32
    %112 = vector.broadcast %cst_53 : f32 to vector<8x128xf32>
    %113 = arith.subf %112, %111 : vector<8x128xf32>
    %114 = arith.mulf %113, %90 : vector<8x128xf32>
    %115 = arith.mulf %101, %111 : vector<8x128xf32>
    %116 = arith.addf %114, %115 : vector<8x128xf32>
    %117 = arith.index_cast %c1_i32 : i32 to index
    %c0_54 = arith.constant 0 : index
    %c0_55 = arith.constant 0 : index
    %118 = vector.load %arg5[%117, %c0_54, %c0_55] : memref<4x8x128xf32, #tpu.memory_space<vmem>>, vector<1x8x128xf32>
    %119 = vector.shape_cast %118 : vector<1x8x128xf32> to vector<8x128xf32>
    %120 = vector.shape_cast %116 : vector<8x128xf32> to vector<1x8x128xf32>
    tpu.vector_store %arg5[%117, %c0_54, %c0_55], %120 {strides = array<i32>} : memref<4x8x128xf32, #tpu.memory_space<vmem>>, vector<1x8x128xf32>,
    %121 = arith.truncf %116 : vector<8x128xf32> to vector<8x128xbf16>
    %c0_56 = arith.constant 0 : index
    %c0_57 = arith.constant 0 : index
    %122 = vector.load %arg3[%c0_56, %c0_57] : memref<128x256xbf16, #tpu.memory_space<vmem>>, vector<128x256xbf16>
    %cst_58 = arith.constant dense<0.000000e+00> : vector<8x256xf32>
    %123 = tpu.matmul %121, %122, %cst_58 {dimension_numbers = #tpu.dot_dimension_numbers<[1], [0], [0], [1], [0, 0, 1, 1], [], []>} : vector<8x128xbf16>, vector<128x256xbf16>, vector<8x256xf32> -> vector<8x256xf32>
    %c0_59 = arith.constant 0 : index
    %c0_60 = arith.constant 0 : index
    %124 = vector.load %arg4[%c0_59, %c0_60] : memref<1x256xf32, #tpu.memory_space<vmem>>, vector<1x256xf32>
    %125 = vector.broadcast %124 : vector<1x256xf32> to vector<8x256xf32>
    %126 = arith.addf %123, %125 : vector<8x256xf32>
    %127 = arith.index_cast %c1_i32 : i32 to index
    %c0_61 = arith.constant 0 : index
    %c0_62 = arith.constant 0 : index
    %128 = vector.load %arg6[%127, %c0_61, %c0_62] : memref<4x8x256xf32, #tpu.memory_space<vmem>>, vector<1x8x256xf32>
    %129 = vector.shape_cast %128 : vector<1x8x256xf32> to vector<8x256xf32>
    %130 = vector.shape_cast %126 : vector<8x256xf32> to vector<1x8x256xf32>
    tpu.vector_store %arg6[%127, %c0_61, %c0_62], %130 {strides = array<i32>} : memref<4x8x256xf32, #tpu.memory_space<vmem>>, vector<1x8x256xf32>,
    %c2_i32 = arith.constant 2 : i32
    %131 = arith.truncf %116 : vector<8x128xf32> to vector<8x128xbf16>
    %c0_63 = arith.constant 0 : index
    %c0_64 = arith.constant 0 : index
    %c0_65 = arith.constant 0 : index
    %132 = vector.load %arg1[%c0_63, %c0_64, %c0_65] : memref<2x128x256xbf16, #tpu.memory_space<vmem>>, vector<1x128x256xbf16>
    %133 = vector.shape_cast %132 : vector<1x128x256xbf16> to vector<128x256xbf16>
    %cst_66 = arith.constant dense<0.000000e+00> : vector<8x256xf32>
    %134 = tpu.matmul %131, %133, %cst_66 {dimension_numbers = #tpu.dot_dimension_numbers<[1], [0], [0], [1], [0, 0, 1, 1], [], []>} : vector<8x128xbf16>, vector<128x256xbf16>, vector<8x256xf32> -> vector<8x256xf32>
    %c0_67 = arith.constant 0 : index
    %c0_68 = arith.constant 0 : index
    %c0_69 = arith.constant 0 : index
    %135 = vector.load %arg2[%c0_67, %c0_68, %c0_69] : memref<2x1x256xf32, #tpu.memory_space<vmem>>, vector<1x1x256xf32>
    %136 = vector.shape_cast %135 : vector<1x1x256xf32> to vector<1x256xf32>
    %137 = vector.broadcast %136 : vector<1x256xf32> to vector<8x256xf32>
    %138 = arith.addf %134, %137 : vector<8x256xf32>
    %139 = vector.extract_strided_slice %138 {offsets = [0, 0], sizes = [8, 128], strides = [1, 1]} : vector<8x256xf32> to vector<8x128xf32>
    %cst_70 = arith.constant 0.000000e+00 : f32
    %140 = vector.broadcast %cst_70 : f32 to vector<8x128xf32>
    %141 = arith.maximumf %139, %140 : vector<8x128xf32>
    %142 = vector.extract_strided_slice %138 {offsets = [0, 128], sizes = [8, 128], strides = [1, 1]} : vector<8x256xf32> to vector<8x128xf32>
    %cst_71 = arith.constant dense<0xFF800000> : vector<8xf32>
    %143 = vector.multi_reduction <maximumf>, %142, %cst_71 [1] : vector<8x128xf32> to vector<8xf32>
    %144 = vector.shape_cast %143 : vector<8xf32> to vector<8x1xf32>
    %145 = vector.broadcast %144 : vector<8x1xf32> to vector<8x128xf32>
    %146 = arith.subf %142, %145 : vector<8x128xf32>
    %147 = math.exp %146 : vector<8x128xf32>
    %cst_72 = arith.constant dense<0.000000e+00> : vector<8xf32>
    %148 = vector.multi_reduction <add>, %147, %cst_72 [1] : vector<8x128xf32> to vector<8xf32>
    %149 = vector.shape_cast %148 : vector<8xf32> to vector<8x1xf32>
    %150 = vector.broadcast %149 : vector<8x1xf32> to vector<8x128xf32>
    %151 = arith.divf %147, %150 : vector<8x128xf32>
    %cst_73 = arith.constant 1.000000e+00 : f32
    %152 = vector.broadcast %cst_73 : f32 to vector<8x128xf32>
    %153 = arith.subf %152, %151 : vector<8x128xf32>
    %154 = arith.mulf %153, %116 : vector<8x128xf32>
    %155 = arith.mulf %141, %151 : vector<8x128xf32>
    %156 = arith.addf %154, %155 : vector<8x128xf32>
    %157 = arith.truncf %156 : vector<8x128xf32> to vector<8x128xbf16>
    %c1_74 = arith.constant 1 : index
    %c0_75 = arith.constant 0 : index
    %c0_76 = arith.constant 0 : index
    %158 = vector.load %arg1[%c1_74, %c0_75, %c0_76] : memref<2x128x256xbf16, #tpu.memory_space<vmem>>, vector<1x128x256xbf16>
    %159 = vector.shape_cast %158 : vector<1x128x256xbf16> to vector<128x256xbf16>
    %cst_77 = arith.constant dense<0.000000e+00> : vector<8x256xf32>
    %160 = tpu.matmul %157, %159, %cst_77 {dimension_numbers = #tpu.dot_dimension_numbers<[1], [0], [0], [1], [0, 0, 1, 1], [], []>} : vector<8x128xbf16>, vector<128x256xbf16>, vector<8x256xf32> -> vector<8x256xf32>
    %c1_78 = arith.constant 1 : index
    %c0_79 = arith.constant 0 : index
    %c0_80 = arith.constant 0 : index
    %161 = vector.load %arg2[%c1_78, %c0_79, %c0_80] : memref<2x1x256xf32, #tpu.memory_space<vmem>>, vector<1x1x256xf32>
    %162 = vector.shape_cast %161 : vector<1x1x256xf32> to vector<1x256xf32>
    %163 = vector.broadcast %162 : vector<1x256xf32> to vector<8x256xf32>
    %164 = arith.addf %160, %163 : vector<8x256xf32>
    %165 = vector.extract_strided_slice %164 {offsets = [0, 0], sizes = [8, 128], strides = [1, 1]} : vector<8x256xf32> to vector<8x128xf32>
    %cst_81 = arith.constant 0.000000e+00 : f32
    %166 = vector.broadcast %cst_81 : f32 to vector<8x128xf32>
    %167 = arith.maximumf %165, %166 : vector<8x128xf32>
    %168 = vector.extract_strided_slice %164 {offsets = [0, 128], sizes = [8, 128], strides = [1, 1]} : vector<8x256xf32> to vector<8x128xf32>
    %cst_82 = arith.constant dense<0xFF800000> : vector<8xf32>
    %169 = vector.multi_reduction <maximumf>, %168, %cst_82 [1] : vector<8x128xf32> to vector<8xf32>
    %170 = vector.shape_cast %169 : vector<8xf32> to vector<8x1xf32>
    %171 = vector.broadcast %170 : vector<8x1xf32> to vector<8x128xf32>
    %172 = arith.subf %168, %171 : vector<8x128xf32>
    %173 = math.exp %172 : vector<8x128xf32>
    %cst_83 = arith.constant dense<0.000000e+00> : vector<8xf32>
    %174 = vector.multi_reduction <add>, %173, %cst_83 [1] : vector<8x128xf32> to vector<8xf32>
    %175 = vector.shape_cast %174 : vector<8xf32> to vector<8x1xf32>
    %176 = vector.broadcast %175 : vector<8x1xf32> to vector<8x128xf32>
    %177 = arith.divf %173, %176 : vector<8x128xf32>
    %cst_84 = arith.constant 1.000000e+00 : f32
    %178 = vector.broadcast %cst_84 : f32 to vector<8x128xf32>
    %179 = arith.subf %178, %177 : vector<8x128xf32>
    %180 = arith.mulf %179, %156 : vector<8x128xf32>
    %181 = arith.mulf %167, %177 : vector<8x128xf32>
    %182 = arith.addf %180, %181 : vector<8x128xf32>
    %183 = arith.index_cast %c2_i32 : i32 to index
    %c0_85 = arith.constant 0 : index
    %c0_86 = arith.constant 0 : index
    %184 = vector.load %arg5[%183, %c0_85, %c0_86] : memref<4x8x128xf32, #tpu.memory_space<vmem>>, vector<1x8x128xf32>
    %185 = vector.shape_cast %184 : vector<1x8x128xf32> to vector<8x128xf32>
    %186 = vector.shape_cast %182 : vector<8x128xf32> to vector<1x8x128xf32>
    tpu.vector_store %arg5[%183, %c0_85, %c0_86], %186 {strides = array<i32>} : memref<4x8x128xf32, #tpu.memory_space<vmem>>, vector<1x8x128xf32>,
    %187 = arith.truncf %182 : vector<8x128xf32> to vector<8x128xbf16>
    %c0_87 = arith.constant 0 : index
    %c0_88 = arith.constant 0 : index
    %188 = vector.load %arg3[%c0_87, %c0_88] : memref<128x256xbf16, #tpu.memory_space<vmem>>, vector<128x256xbf16>
    %cst_89 = arith.constant dense<0.000000e+00> : vector<8x256xf32>
    %189 = tpu.matmul %187, %188, %cst_89 {dimension_numbers = #tpu.dot_dimension_numbers<[1], [0], [0], [1], [0, 0, 1, 1], [], []>} : vector<8x128xbf16>, vector<128x256xbf16>, vector<8x256xf32> -> vector<8x256xf32>
    %c0_90 = arith.constant 0 : index
    %c0_91 = arith.constant 0 : index
    %190 = vector.load %arg4[%c0_90, %c0_91] : memref<1x256xf32, #tpu.memory_space<vmem>>, vector<1x256xf32>
    %191 = vector.broadcast %190 : vector<1x256xf32> to vector<8x256xf32>
    %192 = arith.addf %189, %191 : vector<8x256xf32>
    %193 = arith.index_cast %c2_i32 : i32 to index
    %c0_92 = arith.constant 0 : index
    %c0_93 = arith.constant 0 : index
    %194 = vector.load %arg6[%193, %c0_92, %c0_93] : memref<4x8x256xf32, #tpu.memory_space<vmem>>, vector<1x8x256xf32>
    %195 = vector.shape_cast %194 : vector<1x8x256xf32> to vector<8x256xf32>
    %196 = vector.shape_cast %192 : vector<8x256xf32> to vector<1x8x256xf32>
    tpu.vector_store %arg6[%193, %c0_92, %c0_93], %196 {strides = array<i32>} : memref<4x8x256xf32, #tpu.memory_space<vmem>>, vector<1x8x256xf32>,
    %c3_i32 = arith.constant 3 : i32
    %197 = arith.truncf %182 : vector<8x128xf32> to vector<8x128xbf16>
    %c0_94 = arith.constant 0 : index
    %c0_95 = arith.constant 0 : index
    %c0_96 = arith.constant 0 : index
    %198 = vector.load %arg1[%c0_94, %c0_95, %c0_96] : memref<2x128x256xbf16, #tpu.memory_space<vmem>>, vector<1x128x256xbf16>
    %199 = vector.shape_cast %198 : vector<1x128x256xbf16> to vector<128x256xbf16>
    %cst_97 = arith.constant dense<0.000000e+00> : vector<8x256xf32>
    %200 = tpu.matmul %197, %199, %cst_97 {dimension_numbers = #tpu.dot_dimension_numbers<[1], [0], [0], [1], [0, 0, 1, 1], [], []>} : vector<8x128xbf16>, vector<128x256xbf16>, vector<8x256xf32> -> vector<8x256xf32>
    %c0_98 = arith.constant 0 : index
    %c0_99 = arith.constant 0 : index
    %c0_100 = arith.constant 0 : index
    %201 = vector.load %arg2[%c0_98, %c0_99, %c0_100] : memref<2x1x256xf32, #tpu.memory_space<vmem>>, vector<1x1x256xf32>
    %202 = vector.shape_cast %201 : vector<1x1x256xf32> to vector<1x256xf32>
    %203 = vector.broadcast %202 : vector<1x256xf32> to vector<8x256xf32>
    %204 = arith.addf %200, %203 : vector<8x256xf32>
    %205 = vector.extract_strided_slice %204 {offsets = [0, 0], sizes = [8, 128], strides = [1, 1]} : vector<8x256xf32> to vector<8x128xf32>
    %cst_101 = arith.constant 0.000000e+00 : f32
    %206 = vector.broadcast %cst_101 : f32 to vector<8x128xf32>
    %207 = arith.maximumf %205, %206 : vector<8x128xf32>
    %208 = vector.extract_strided_slice %204 {offsets = [0, 128], sizes = [8, 128], strides = [1, 1]} : vector<8x256xf32> to vector<8x128xf32>
    %cst_102 = arith.constant dense<0xFF800000> : vector<8xf32>
    %209 = vector.multi_reduction <maximumf>, %208, %cst_102 [1] : vector<8x128xf32> to vector<8xf32>
    %210 = vector.shape_cast %209 : vector<8xf32> to vector<8x1xf32>
    %211 = vector.broadcast %210 : vector<8x1xf32> to vector<8x128xf32>
    %212 = arith.subf %208, %211 : vector<8x128xf32>
    %213 = math.exp %212 : vector<8x128xf32>
    %cst_103 = arith.constant dense<0.000000e+00> : vector<8xf32>
    %214 = vector.multi_reduction <add>, %213, %cst_103 [1] : vector<8x128xf32> to vector<8xf32>
    %215 = vector.shape_cast %214 : vector<8xf32> to vector<8x1xf32>
    %216 = vector.broadcast %215 : vector<8x1xf32> to vector<8x128xf32>
    %217 = arith.divf %213, %216 : vector<8x128xf32>
    %cst_104 = arith.constant 1.000000e+00 : f32
    %218 = vector.broadcast %cst_104 : f32 to vector<8x128xf32>
    %219 = arith.subf %218, %217 : vector<8x128xf32>
    %220 = arith.mulf %219, %182 : vector<8x128xf32>
    %221 = arith.mulf %207, %217 : vector<8x128xf32>
    %222 = arith.addf %220, %221 : vector<8x128xf32>
    %223 = arith.truncf %222 : vector<8x128xf32> to vector<8x128xbf16>
    %c1_105 = arith.constant 1 : index
    %c0_106 = arith.constant 0 : index
    %c0_107 = arith.constant 0 : index
    %224 = vector.load %arg1[%c1_105, %c0_106, %c0_107] : memref<2x128x256xbf16, #tpu.memory_space<vmem>>, vector<1x128x256xbf16>
    %225 = vector.shape_cast %224 : vector<1x128x256xbf16> to vector<128x256xbf16>
    %cst_108 = arith.constant dense<0.000000e+00> : vector<8x256xf32>
    %226 = tpu.matmul %223, %225, %cst_108 {dimension_numbers = #tpu.dot_dimension_numbers<[1], [0], [0], [1], [0, 0, 1, 1], [], []>} : vector<8x128xbf16>, vector<128x256xbf16>, vector<8x256xf32> -> vector<8x256xf32>
    %c1_109 = arith.constant 1 : index
    %c0_110 = arith.constant 0 : index
    %c0_111 = arith.constant 0 : index
    %227 = vector.load %arg2[%c1_109, %c0_110, %c0_111] : memref<2x1x256xf32, #tpu.memory_space<vmem>>, vector<1x1x256xf32>
    %228 = vector.shape_cast %227 : vector<1x1x256xf32> to vector<1x256xf32>
    %229 = vector.broadcast %228 : vector<1x256xf32> to vector<8x256xf32>
    %230 = arith.addf %226, %229 : vector<8x256xf32>
    %231 = vector.extract_strided_slice %230 {offsets = [0, 0], sizes = [8, 128], strides = [1, 1]} : vector<8x256xf32> to vector<8x128xf32>
    %cst_112 = arith.constant 0.000000e+00 : f32
    %232 = vector.broadcast %cst_112 : f32 to vector<8x128xf32>
    %233 = arith.maximumf %231, %232 : vector<8x128xf32>
    %234 = vector.extract_strided_slice %230 {offsets = [0, 128], sizes = [8, 128], strides = [1, 1]} : vector<8x256xf32> to vector<8x128xf32>
    %cst_113 = arith.constant dense<0xFF800000> : vector<8xf32>
    %235 = vector.multi_reduction <maximumf>, %234, %cst_113 [1] : vector<8x128xf32> to vector<8xf32>
    %236 = vector.shape_cast %235 : vector<8xf32> to vector<8x1xf32>
    %237 = vector.broadcast %236 : vector<8x1xf32> to vector<8x128xf32>
    %238 = arith.subf %234, %237 : vector<8x128xf32>
    %239 = math.exp %238 : vector<8x128xf32>
    %cst_114 = arith.constant dense<0.000000e+00> : vector<8xf32>
    %240 = vector.multi_reduction <add>, %239, %cst_114 [1] : vector<8x128xf32> to vector<8xf32>
    %241 = vector.shape_cast %240 : vector<8xf32> to vector<8x1xf32>
    %242 = vector.broadcast %241 : vector<8x1xf32> to vector<8x128xf32>
    %243 = arith.divf %239, %242 : vector<8x128xf32>
    %cst_115 = arith.constant 1.000000e+00 : f32
    %244 = vector.broadcast %cst_115 : f32 to vector<8x128xf32>
    %245 = arith.subf %244, %243 : vector<8x128xf32>
    %246 = arith.mulf %245, %222 : vector<8x128xf32>
    %247 = arith.mulf %233, %243 : vector<8x128xf32>
    %248 = arith.addf %246, %247 : vector<8x128xf32>
    %249 = arith.index_cast %c3_i32 : i32 to index
    %c0_116 = arith.constant 0 : index
    %c0_117 = arith.constant 0 : index
    %250 = vector.load %arg5[%249, %c0_116, %c0_117] : memref<4x8x128xf32, #tpu.memory_space<vmem>>, vector<1x8x128xf32>
    %251 = vector.shape_cast %250 : vector<1x8x128xf32> to vector<8x128xf32>
    %252 = vector.shape_cast %248 : vector<8x128xf32> to vector<1x8x128xf32>
    tpu.vector_store %arg5[%249, %c0_116, %c0_117], %252 {strides = array<i32>} : memref<4x8x128xf32, #tpu.memory_space<vmem>>, vector<1x8x128xf32>,
    %253 = arith.truncf %248 : vector<8x128xf32> to vector<8x128xbf16>
    %c0_118 = arith.constant 0 : index
    %c0_119 = arith.constant 0 : index
    %254 = vector.load %arg3[%c0_118, %c0_119] : memref<128x256xbf16, #tpu.memory_space<vmem>>, vector<128x256xbf16>
    %cst_120 = arith.constant dense<0.000000e+00> : vector<8x256xf32>
    %255 = tpu.matmul %253, %254, %cst_120 {dimension_numbers = #tpu.dot_dimension_numbers<[1], [0], [0], [1], [0, 0, 1, 1], [], []>} : vector<8x128xbf16>, vector<128x256xbf16>, vector<8x256xf32> -> vector<8x256xf32>
    %c0_121 = arith.constant 0 : index
    %c0_122 = arith.constant 0 : index
    %256 = vector.load %arg4[%c0_121, %c0_122] : memref<1x256xf32, #tpu.memory_space<vmem>>, vector<1x256xf32>
    %257 = vector.broadcast %256 : vector<1x256xf32> to vector<8x256xf32>
    %258 = arith.addf %255, %257 : vector<8x256xf32>
    %259 = arith.index_cast %c3_i32 : i32 to index
    %c0_123 = arith.constant 0 : index
    %c0_124 = arith.constant 0 : index
    %260 = vector.load %arg6[%259, %c0_123, %c0_124] : memref<4x8x256xf32, #tpu.memory_space<vmem>>, vector<1x8x256xf32>
    %261 = vector.shape_cast %260 : vector<1x8x256xf32> to vector<8x256xf32>
    %262 = vector.shape_cast %258 : vector<8x256xf32> to vector<1x8x256xf32>
    tpu.vector_store %arg6[%259, %c0_123, %c0_124], %262 {strides = array<i32>} : memref<4x8x256xf32, #tpu.memory_space<vmem>>, vector<1x8x256xf32>,
    %c3_i32_125 = arith.constant 3 : i32
    return
  }
}

</mosaic_0001>

<llo_original>
// kernel: language_model_forward.1
$region0: #{language_model_forward.1}
  #allocation0 [shape = 'u32[]', space=smem, size = 0x4, offset = 0x4, fixed_abs, tag = 'smem constant byte address 0x4 - core index']
  #allocation1 [shape = 'u32[144,128]{1,0:T(1,128)}', space=vmem, size = 0x12000, scoped, tag = 'internal scratch']
  %s0 = inlined_call_operand.vmem [shape: f32[8,128], index: 0, kind: input, shape index: {}]
  %s1 = inlined_call_operand.hbm [shape: bf16[2,128,256], index: 1, kind: input, shape index: {}]
  %s2 = inlined_call_operand.vmem [shape: f32[2,1,256], index: 2, kind: input, shape index: {}]
  %s3 = inlined_call_operand.hbm [shape: bf16[128,256], index: 3, kind: input, shape index: {}]
  %s4 = inlined_call_operand.vmem [shape: f32[1,256], index: 4, kind: input, shape index: {}]
  %s5 = inlined_call_operand.hbm [shape: f32[4,8,128], index: 5, kind: output, shape index: {0}]
  %s6 = inlined_call_operand.hbm [shape: f32[4,8,256], index: 6, kind: output, shape index: {1}]
  %7 = xla_tuple %s5, %s6
  %s8 = sld [smem:[#allocation0]]
  $region46: #{language_model_forward.1} parent=0
    _
  %s10 = ssub.s32 1, %s8
  %s11 = scalar_select 0, %s10, %s8
  $region1: #{language_model_forward.1} parent=0
    #allocation2 [shape = 'u8[131072]{0}', space=vmem, size = 0x20000, scoped, tag = 'input window, operand 1, single buffered']
    #allocation3 [shape = 's32[1]{0}', space=sflag, size = 0x4, scoped, tag = 'scoped memory for language_model_forward.1']
    #allocation4 [shape = 's32[1]{0}', space=sflag, size = 0x4, scoped, tag = 'scoped memory for language_model_forward.1']
    #allocation5 [shape = 'u8[65536]{0}', space=vmem, size = 0x10000, scoped, tag = 'input window, operand 3, single buffered']
    #allocation6 [shape = 's32[1]{0}', space=sflag, size = 0x4, scoped, tag = 'scoped memory for language_model_forward.1']
    #allocation7 [shape = 'u8[16384]{0}', space=vmem, size = 0x4000, scoped, tag = 'output window, operand 0, single buffered']
    #allocation8 [shape = 'u8[32768]{0}', space=vmem, size = 0x8000, scoped, tag = 'output window, operand 1, single buffered']
    #allocation9 [shape = 's32[1]{0}', space=sflag, size = 0x4, scoped, tag = 'scoped memory for language_model_forward.1']
    %12 = vsyncpa [#allocation3], 0
    %13 = vsyncpa [#allocation6], 0
    %14 = vsyncpa [#allocation4], 0
    %15 = vsyncpa [#allocation9], 0
    // Predicated region
    $region2: #{language_model_forward.1} parent=1 // pred_check
      _
    $region3: #{language_model_forward.1} parent=1 // pred_check_branch
      %17 = sbr.rel (0) target = $region5
    $region4: #{language_model_forward.1} parent=1 // pred_region
      _
    $region5: #{language_model_forward.1} parent=1 // pred_fallthru
      _
    // Predicated region
    $region6: #{language_model_forward.1} parent=1 // pred_check
      _
    $region7: #{language_model_forward.1} parent=1 // pred_check_branch
      %19 = sbr.rel (0) target = $region9
    $region8: #{language_model_forward.1} parent=1 // pred_region
      %s21 = ssub.s32 4096, 4096
      %22 = vsyncadd [#allocation3], %s21
      %s23 = sshll.u32 [#allocation2], 4
      %s24 = int_to_ptr.vmem [resolvable:$true] %s23
      %29 = dma.hbm_to_vmem [thread:$0]  %s1, 4096, %s24, [#allocation3], 128, 128, 8
    $region9: #{language_model_forward.1} parent=1 // pred_fallthru
      _
    // Predicated region
    $region10: #{language_model_forward.1} parent=1 // pred_check
      _
    $region11: #{language_model_forward.1} parent=1 // pred_check_branch
      %31 = sbr.rel (0) target = $region13
    $region12: #{language_model_forward.1} parent=1 // pred_region
      _
    $region13: #{language_model_forward.1} parent=1 // pred_fallthru
      _
    // Predicated region
    $region14: #{language_model_forward.1} parent=1 // pred_check
      _
    $region15: #{language_model_forward.1} parent=1 // pred_check_branch
      %33 = sbr.rel (0) target = $region17
    $region16: #{language_model_forward.1} parent=1 // pred_region
      %s35 = ssub.s32 2048, 2048
      %36 = vsyncadd [#allocation6], %s35
      %s37 = sshll.u32 [#allocation5], 4
      %s38 = int_to_ptr.vmem [resolvable:$true] %s37
      %43 = dma.hbm_to_vmem [thread:$0]  %s3, 2048, %s38, [#allocation6], 128, 128, 8
    $region17: #{language_model_forward.1} parent=1 // pred_fallthru
      _
    // Predicated region
    $region18: #{language_model_forward.1} parent=1 // pred_check
      _
    $region19: #{language_model_forward.1} parent=1 // pred_check_branch
      %45 = sbr.rel (0) target = $region21
    $region20: #{language_model_forward.1} parent=1 // pred_region
      _
    $region21: #{language_model_forward.1} parent=1 // pred_fallthru
      _
    // Predicated region
    $region22: #{language_model_forward.1} parent=1 // pred_check
      _
    $region23: #{language_model_forward.1} parent=1 // pred_check_branch
      %47 = sbr.rel (0) target = $region25
    $region24: #{language_model_forward.1} parent=1 // pred_region
      %48 = dma.done [#allocation3], 4096
    $region25: #{language_model_forward.1} parent=1 // pred_fallthru
      _
    // Predicated region
    $region26: #{language_model_forward.1} parent=1 // pred_check
      _
    $region27: #{language_model_forward.1} parent=1 // pred_check_branch
      %50 = sbr.rel (0) target = $region29
    $region28: #{language_model_forward.1} parent=1 // pred_region
      %51 = dma.done [#allocation6], 2048
    $region29: #{language_model_forward.1} parent=1 // pred_fallthru
      _
    %v53 = vld [vmem:[%s0] sm:$0xff]
    %v54 = vpack.c.bf16 %v53, %v53
    %v55 = vld [vmem:[#allocation2] sm:$0xff]
    %v56 = vld [vmem:[#allocation2 + $0x8] sm:$0xff]
    %v57 = vld [vmem:[#allocation2 + $0x10] sm:$0xff]
    %v58 = vld [vmem:[#allocation2 + $0x18] sm:$0xff]
    %v59 = vld [vmem:[#allocation2 + $0x20] sm:$0xff]
    %v60 = vld [vmem:[#allocation2 + $0x28] sm:$0xff]
    %v61 = vld [vmem:[#allocation2 + $0x30] sm:$0xff]
    %v62 = vld [vmem:[#allocation2 + $0x38] sm:$0xff]
    %v63 = vld [vmem:[#allocation2 + $0x40] sm:$0xff]
    %v64 = vld [vmem:[#allocation2 + $0x48] sm:$0xff]
    %v65 = vld [vmem:[#allocation2 + $0x50] sm:$0xff]
    %v66 = vld [vmem:[#allocation2 + $0x58] sm:$0xff]
    %v67 = vld [vmem:[#allocation2 + $0x60] sm:$0xff]
    %v68 = vld [vmem:[#allocation2 + $0x68] sm:$0xff]
    %v69 = vld [vmem:[#allocation2 + $0x70] sm:$0xff]
    %v70 = vld [vmem:[#allocation2 + $0x78] sm:$0xff]
    %v71 = vld [vmem:[%s2] sm:$0x3]
    %v73 = vlaneseq
    %v74 = vshrl.u32 %v73, 7
    %v75 = vsub.s32 0, %v74
    %v76 = vrot.slane %v71, %v75
    %v77 = vlaneseq
    %v78 = vshrl.u32 %v77, 7
    %v79 = vsub.s32 1, %v78
    %v80 = vrot.slane %v71, %v79
    %v99 = vunpack.c.l.b16 %v55
    %v100 = vunpack.c.h.b16 %v55
    %v101 = vunpack.c.l.b16 %v56
    %v102 = vunpack.c.h.b16 %v56
    %v103 = vunpack.c.l.b16 %v57
    %v104 = vunpack.c.h.b16 %v57
    %v105 = vunpack.c.l.b16 %v58
    %v106 = vunpack.c.h.b16 %v58
    %v107 = vunpack.c.l.b16 %v59
    %v108 = vunpack.c.h.b16 %v59
    %v109 = vunpack.c.l.b16 %v60
    %v110 = vunpack.c.h.b16 %v60
    %v111 = vunpack.c.l.b16 %v61
    %v112 = vunpack.c.h.b16 %v61
    %v113 = vunpack.c.l.b16 %v62
    %v114 = vunpack.c.h.b16 %v62
    %v115 = vunpack.c.l.b16 %v63
    %v116 = vunpack.c.h.b16 %v63
    %v117 = vunpack.c.l.b16 %v64
    %v118 = vunpack.c.h.b16 %v64
    %v119 = vunpack.c.l.b16 %v65
    %v120 = vunpack.c.h.b16 %v65
    %v121 = vunpack.c.l.b16 %v66
    %v122 = vunpack.c.h.b16 %v66
    %v123 = vunpack.c.l.b16 %v67
    %v124 = vunpack.c.h.b16 %v67
    %v125 = vunpack.c.l.b16 %v68
    %v126 = vunpack.c.h.b16 %v68
    %v127 = vunpack.c.l.b16 %v69
    %v128 = vunpack.c.h.b16 %v69
    %v129 = vunpack.c.l.b16 %v70
    %v130 = vunpack.c.h.b16 %v70
    %v131 = vpack.c.b16 %v101, %v99
    %v132 = vpack.c.b16 %v102, %v100
    %v133 = vpack.c.b16 %v105, %v103
    %v134 = vpack.c.b16 %v106, %v104
    %v135 = vpack.c.b16 %v109, %v107
    %v136 = vpack.c.b16 %v110, %v108
    %v137 = vpack.c.b16 %v113, %v111
    %v138 = vpack.c.b16 %v114, %v112
    %v139 = vpack.c.b16 %v117, %v115
    %v140 = vpack.c.b16 %v118, %v116
    %v141 = vpack.c.b16 %v121, %v119
    %v142 = vpack.c.b16 %v122, %v120
    %v143 = vpack.c.b16 %v125, %v123
    %v144 = vpack.c.b16 %v126, %v124
    %v145 = vpack.c.b16 %v129, %v127
    %v146 = vpack.c.b16 %v130, %v128
    %163 = vmatprep.subr.bf16.mxu0 %v132
    %164 = vmatpush1.bf16.msra.mxu0 %v131
    %165 = vmatprep.subr.bf16.mxu0 %v134
    %166 = vmatpush1.bf16.msra.mxu0 %v133
    %167 = vmatprep.subr.bf16.mxu0 %v136
    %168 = vmatpush1.bf16.msra.mxu0 %v135
    %169 = vmatprep.subr.bf16.mxu0 %v138
    %170 = vmatpush1.bf16.msra.mxu0 %v137
    %171 = vmatprep.subr.bf16.mxu0 %v140
    %172 = vmatpush1.bf16.msra.mxu0 %v139
    %173 = vmatprep.subr.bf16.mxu0 %v142
    %174 = vmatpush1.bf16.msra.mxu0 %v141
    %175 = vmatprep.subr.bf16.mxu0 %v144
    %176 = vmatpush1.bf16.msra.mxu0 %v143
    %177 = vmatprep.subr.bf16.mxu0 %v146
    %178 = vmatpush1.bf16.msra.mxu0 %v145
    %179 = vmatprep.subr.bf16.mxu0 0
    %180 = vmatpush1.bf16.msra.mxu0 0
    %181 = vmatprep.subr.bf16.mxu0 0
    %182 = vmatpush1.bf16.msra.mxu0 0
    %183 = vmatprep.subr.bf16.mxu0 0
    %184 = vmatpush1.bf16.msra.mxu0 0
    %185 = vmatprep.subr.bf16.mxu0 0
    %186 = vmatpush1.bf16.msra.mxu0 0
    %187 = vmatprep.subr.bf16.mxu0 0
    %188 = vmatpush1.bf16.msra.mxu0 0
    %189 = vmatprep.subr.bf16.mxu0 0
    %190 = vmatpush1.bf16.msra.mxu0 0
    %191 = vmatprep.subr.bf16.mxu0 0
    %192 = vmatpush1.bf16.msra.mxu0 0
    %193 = vmatprep.subr.bf16.mxu0 0
    %194 = vmatpush1.bf16.msra.mxu0 0
    %195 = vmatprep.mubr.bf16.mxu0 0
    %196 = vmatmul.mubr.bf16.gmra.mrb[0].mxu0 %v54
    %v197 = vpop.f32.mrb[0].mxu0
    %v198 = vadd.f32 %v76, %v197
    %v199 = vpop.f32.mrb[0].mxu0
    %v200 = vadd.f32 %v80, %v199
    %v201 = vpop.f32.mrb[0].mxu0
    %v202 = vpop.f32.mrb[0].mxu0
    %203 = vdwg.mxu0
    %v204 = vmax.f32 %v198, 0.0
    %205 = vmax.xlane.f32.xlu0 %v200
    %v206 = vpop.xlane.xlu0 %205
    %v207 = vsub.f32 %v200, %v206
    %v208 = vmul.f32 %v207, 1.442695
    %v209 = vpow.pop %v208
    %210 = vadd.xlane.f32.xlu0 %v209
    %v211 = vpop.xlane.xlu0 %210
    %v212 = vrcp.pop %v211
    %v213 = vmul.f32 %v209, %v212
    %v214 = vsub.f32 1.0, %v213
    %v215 = vmul.f32 %v214, %v53
    %v216 = vmul.f32 %v204, %v213
    %v217 = vadd.f32 %v215, %v216
    %v218 = vpack.c.bf16 %v217, %v217
    %s219 = scalar_lea.vmem [#allocation2], 128
    %v220 = vld [vmem:[%s219] sm:$0xff]
    %v221 = vld [vmem:[%s219 + $0x8] sm:$0xff]
    %v222 = vld [vmem:[%s219 + $0x10] sm:$0xff]
    %v223 = vld [vmem:[%s219 + $0x18] sm:$0xff]
    %v224 = vld [vmem:[%s219 + $0x20] sm:$0xff]
    %v225 = vld [vmem:[%s219 + $0x28] sm:$0xff]
    %v226 = vld [vmem:[%s219 + $0x30] sm:$0xff]
    %v227 = vld [vmem:[%s219 + $0x38] sm:$0xff]
    %v228 = vld [vmem:[%s219 + $0x40] sm:$0xff]
    %v229 = vld [vmem:[%s219 + $0x48] sm:$0xff]
    %v230 = vld [vmem:[%s219 + $0x50] sm:$0xff]
    %v231 = vld [vmem:[%s219 + $0x58] sm:$0xff]
    %v232 = vld [vmem:[%s219 + $0x60] sm:$0xff]
    %v233 = vld [vmem:[%s219 + $0x68] sm:$0xff]
    %v234 = vld [vmem:[%s219 + $0x70] sm:$0xff]
    %v235 = vld [vmem:[%s219 + $0x78] sm:$0xff]
    %s236 = scalar_lea.vmem %s2, 2
    %v237 = vld [vmem:[%s236] sm:$0x3]
    %v239 = vlaneseq
    %v240 = vshrl.u32 %v239, 7
    %v241 = vsub.s32 0, %v240
    %v242 = vrot.slane %v237, %v241
    %v243 = vlaneseq
    %v244 = vshrl.u32 %v243, 7
    %v245 = vsub.s32 1, %v244
    %v246 = vrot.slane %v237, %v245
    %v265 = vunpack.c.l.b16 %v220
    %v266 = vunpack.c.h.b16 %v220
    %v267 = vunpack.c.l.b16 %v221
    %v268 = vunpack.c.h.b16 %v221
    %v269 = vunpack.c.l.b16 %v222
    %v270 = vunpack.c.h.b16 %v222
    %v271 = vunpack.c.l.b16 %v223
    %v272 = vunpack.c.h.b16 %v223
    %v273 = vunpack.c.l.b16 %v224
    %v274 = vunpack.c.h.b16 %v224
    %v275 = vunpack.c.l.b16 %v225
    %v276 = vunpack.c.h.b16 %v225
    %v277 = vunpack.c.l.b16 %v226
    %v278 = vunpack.c.h.b16 %v226
    %v279 = vunpack.c.l.b16 %v227
    %v280 = vunpack.c.h.b16 %v227
    %v281 = vunpack.c.l.b16 %v228
    %v282 = vunpack.c.h.b16 %v228
    %v283 = vunpack.c.l.b16 %v229
    %v284 = vunpack.c.h.b16 %v229
    %v285 = vunpack.c.l.b16 %v230
    %v286 = vunpack.c.h.b16 %v230
    %v287 = vunpack.c.l.b16 %v231
    %v288 = vunpack.c.h.b16 %v231
    %v289 = vunpack.c.l.b16 %v232
    %v290 = vunpack.c.h.b16 %v232
    %v291 = vunpack.c.l.b16 %v233
    %v292 = vunpack.c.h.b16 %v233
    %v293 = vunpack.c.l.b16 %v234
    %v294 = vunpack.c.h.b16 %v234
    %v295 = vunpack.c.l.b16 %v235
    %v296 = vunpack.c.h.b16 %v235
    %v297 = vpack.c.b16 %v267, %v265
    %v298 = vpack.c.b16 %v268, %v266
    %v299 = vpack.c.b16 %v271, %v269
    %v300 = vpack.c.b16 %v272, %v270
    %v301 = vpack.c.b16 %v275, %v273
    %v302 = vpack.c.b16 %v276, %v274
    %v303 = vpack.c.b16 %v279, %v277
    %v304 = vpack.c.b16 %v280, %v278
    %v305 = vpack.c.b16 %v283, %v281
    %v306 = vpack.c.b16 %v284, %v282
    %v307 = vpack.c.b16 %v287, %v285
    %v308 = vpack.c.b16 %v288, %v286
    %v309 = vpack.c.b16 %v291, %v289
    %v310 = vpack.c.b16 %v292, %v290
    %v311 = vpack.c.b16 %v295, %v293
    %v312 = vpack.c.b16 %v296, %v294
    %329 = vmatprep.subr.bf16.mxu0 %v298
    %330 = vmatpush1.bf16.msra.mxu0 %v297
    %331 = vmatprep.subr.bf16.mxu0 %v300
    %332 = vmatpush1.bf16.msra.mxu0 %v299
    %333 = vmatprep.subr.bf16.mxu0 %v302
    %334 = vmatpush1.bf16.msra.mxu0 %v301
    %335 = vmatprep.subr.bf16.mxu0 %v304
    %336 = vmatpush1.bf16.msra.mxu0 %v303
    %337 = vmatprep.subr.bf16.mxu0 %v306
    %338 = vmatpush1.bf16.msra.mxu0 %v305
    %339 = vmatprep.subr.bf16.mxu0 %v308
    %340 = vmatpush1.bf16.msra.mxu0 %v307
    %341 = vmatprep.subr.bf16.mxu0 %v310
    %342 = vmatpush1.bf16.msra.mxu0 %v309
    %343 = vmatprep.subr.bf16.mxu0 %v312
    %344 = vmatpush1.bf16.msra.mxu0 %v311
    %345 = vmatprep.subr.bf16.mxu0 0
    %346 = vmatpush1.bf16.msra.mxu0 0
    %347 = vmatprep.subr.bf16.mxu0 0
    %348 = vmatpush1.bf16.msra.mxu0 0
    %349 = vmatprep.subr.bf16.mxu0 0
    %350 = vmatpush1.bf16.msra.mxu0 0
    %351 = vmatprep.subr.bf16.mxu0 0
    %352 = vmatpush1.bf16.msra.mxu0 0
    %353 = vmatprep.subr.bf16.mxu0 0
    %354 = vmatpush1.bf16.msra.mxu0 0
    %355 = vmatprep.subr.bf16.mxu0 0
    %356 = vmatpush1.bf16.msra.mxu0 0
    %357 = vmatprep.subr.bf16.mxu0 0
    %358 = vmatpush1.bf16.msra.mxu0 0
    %359 = vmatprep.subr.bf16.mxu0 0
    %360 = vmatpush1.bf16.msra.mxu0 0
    %361 = vmatprep.mubr.bf16.mxu0 0
    %362 = vmatmul.mubr.bf16.gmra.mrb[0].mxu0 %v218
    %v363 = vpop.f32.mrb[0].mxu0
    %v364 = vadd.f32 %v242, %v363
    %v365 = vpop.f32.mrb[0].mxu0
    %v366 = vadd.f32 %v246, %v365
    %v367 = vpop.f32.mrb[0].mxu0
    %v368 = vpop.f32.mrb[0].mxu0
    %369 = vdwg.mxu0
    %v370 = vmax.f32 %v364, 0.0
    %371 = vmax.xlane.f32.xlu0 %v366
    %v372 = vpop.xlane.xlu0 %371
    %v373 = vsub.f32 %v366, %v372
    %v374 = vmul.f32 %v373, 1.442695
    %v375 = vpow.pop %v374
    %376 = vadd.xlane.f32.xlu0 %v375
    %v377 = vpop.xlane.xlu0 %376
    %v378 = vrcp.pop %v377
    %v379 = vmul.f32 %v375, %v378
    %v380 = vsub.f32 1.0, %v379
    %v381 = vmul.f32 %v380, %v217
    %v382 = vmul.f32 %v370, %v379
    %v383 = vadd.f32 %v381, %v382
    %384 = vst [vmem:[#allocation7] sm:$0xff] %v383
    %v385 = vpack.c.bf16 %v383, %v383
    %v386 = vld [vmem:[#allocation5] sm:$0xff]
    %v387 = vld [vmem:[#allocation5 + $0x8] sm:$0xff]
    %v388 = vld [vmem:[#allocation5 + $0x10] sm:$0xff]
    %v389 = vld [vmem:[#allocation5 + $0x18] sm:$0xff]
    %v390 = vld [vmem:[#allocation5 + $0x20] sm:$0xff]
    %v391 = vld [vmem:[#allocation5 + $0x28] sm:$0xff]
    %v392 = vld [vmem:[#allocation5 + $0x30] sm:$0xff]
    %v393 = vld [vmem:[#allocation5 + $0x38] sm:$0xff]
    %v394 = vld [vmem:[#allocation5 + $0x40] sm:$0xff]
    %v395 = vld [vmem:[#allocation5 + $0x48] sm:$0xff]
    %v396 = vld [vmem:[#allocation5 + $0x50] sm:$0xff]
    %v397 = vld [vmem:[#allocation5 + $0x58] sm:$0xff]
    %v398 = vld [vmem:[#allocation5 + $0x60] sm:$0xff]
    %v399 = vld [vmem:[#allocation5 + $0x68] sm:$0xff]
    %v400 = vld [vmem:[#allocation5 + $0x70] sm:$0xff]
    %v401 = vld [vmem:[#allocation5 + $0x78] sm:$0xff]
    %v402 = vld [vmem:[%s4] sm:$0x3]
    %v404 = vlaneseq
    %v405 = vshrl.u32 %v404, 7
    %v406 = vsub.s32 0, %v405
    %v407 = vrot.slane %v402, %v406
    %v408 = vlaneseq
    %v409 = vshrl.u32 %v408, 7
    %v410 = vsub.s32 1, %v409
    %v411 = vrot.slane %v402, %v410
    %v430 = vunpack.c.l.b16 %v386
    %v431 = vunpack.c.h.b16 %v386
    %v432 = vunpack.c.l.b16 %v387
    %v433 = vunpack.c.h.b16 %v387
    %v434 = vunpack.c.l.b16 %v388
    %v435 = vunpack.c.h.b16 %v388
    %v436 = vunpack.c.l.b16 %v389
    %v437 = vunpack.c.h.b16 %v389
    %v438 = vunpack.c.l.b16 %v390
    %v439 = vunpack.c.h.b16 %v390
    %v440 = vunpack.c.l.b16 %v391
    %v441 = vunpack.c.h.b16 %v391
    %v442 = vunpack.c.l.b16 %v392
    %v443 = vunpack.c.h.b16 %v392
    %v444 = vunpack.c.l.b16 %v393
    %v445 = vunpack.c.h.b16 %v393
    %v446 = vunpack.c.l.b16 %v394
    %v447 = vunpack.c.h.b16 %v394
    %v448 = vunpack.c.l.b16 %v395
    %v449 = vunpack.c.h.b16 %v395
    %v450 = vunpack.c.l.b16 %v396
    %v451 = vunpack.c.h.b16 %v396
    %v452 = vunpack.c.l.b16 %v397
    %v453 = vunpack.c.h.b16 %v397
    %v454 = vunpack.c.l.b16 %v398
    %v455 = vunpack.c.h.b16 %v398
    %v456 = vunpack.c.l.b16 %v399
    %v457 = vunpack.c.h.b16 %v399
    %v458 = vunpack.c.l.b16 %v400
    %v459 = vunpack.c.h.b16 %v400
    %v460 = vunpack.c.l.b16 %v401
    %v461 = vunpack.c.h.b16 %v401
    %v462 = vpack.c.b16 %v432, %v430
    %v463 = vpack.c.b16 %v433, %v431
    %v464 = vpack.c.b16 %v436, %v434
    %v465 = vpack.c.b16 %v437, %v435
    %v466 = vpack.c.b16 %v440, %v438
    %v467 = vpack.c.b16 %v441, %v439
    %v468 = vpack.c.b16 %v444, %v442
    %v469 = vpack.c.b16 %v445, %v443
    %v470 = vpack.c.b16 %v448, %v446
    %v471 = vpack.c.b16 %v449, %v447
    %v472 = vpack.c.b16 %v452, %v450
    %v473 = vpack.c.b16 %v453, %v451
    %v474 = vpack.c.b16 %v456, %v454
    %v475 = vpack.c.b16 %v457, %v455
    %v476 = vpack.c.b16 %v460, %v458
    %v477 = vpack.c.b16 %v461, %v459
    %494 = vmatprep.subr.bf16.mxu0 %v463
    %495 = vmatpush1.bf16.msra.mxu0 %v462
    %496 = vmatprep.subr.bf16.mxu0 %v465
    %497 = vmatpush1.bf16.msra.mxu0 %v464
    %498 = vmatprep.subr.bf16.mxu0 %v467
    %499 = vmatpush1.bf16.msra.mxu0 %v466
    %500 = vmatprep.subr.bf16.mxu0 %v469
    %501 = vmatpush1.bf16.msra.mxu0 %v468
    %502 = vmatprep.subr.bf16.mxu0 %v471
    %503 = vmatpush1.bf16.msra.mxu0 %v470
    %504 = vmatprep.subr.bf16.mxu0 %v473
    %505 = vmatpush1.bf16.msra.mxu0 %v472
    %506 = vmatprep.subr.bf16.mxu0 %v475
    %507 = vmatpush1.bf16.msra.mxu0 %v474
    %508 = vmatprep.subr.bf16.mxu0 %v477
    %509 = vmatpush1.bf16.msra.mxu0 %v476
    %510 = vmatprep.subr.bf16.mxu0 0
    %511 = vmatpush1.bf16.msra.mxu0 0
    %512 = vmatprep.subr.bf16.mxu0 0
    %513 = vmatpush1.bf16.msra.mxu0 0
    %514 = vmatprep.subr.bf16.mxu0 0
    %515 = vmatpush1.bf16.msra.mxu0 0
    %516 = vmatprep.subr.bf16.mxu0 0
    %517 = vmatpush1.bf16.msra.mxu0 0
    %518 = vmatprep.subr.bf16.mxu0 0
    %519 = vmatpush1.bf16.msra.mxu0 0
    %520 = vmatprep.subr.bf16.mxu0 0
    %521 = vmatpush1.bf16.msra.mxu0 0
    %522 = vmatprep.subr.bf16.mxu0 0
    %523 = vmatpush1.bf16.msra.mxu0 0
    %524 = vmatprep.subr.bf16.mxu0 0
    %525 = vmatpush1.bf16.msra.mxu0 0
    %526 = vmatprep.mubr.bf16.mxu0 0
    %527 = vmatmul.mubr.bf16.gmra.mrb[0].mxu0 %v385
    %v528 = vpop.f32.mrb[0].mxu0
    %v529 = vadd.f32 %v407, %v528
    %v530 = vpop.f32.mrb[0].mxu0
    %v531 = vadd.f32 %v411, %v530
    %v532 = vpop.f32.mrb[0].mxu0
    %v533 = vpop.f32.mrb[0].mxu0
    %534 = vdwg.mxu0
    %535 = vst [vmem:[#allocation8] sm:$0xff] %v529
    %536 = vst [vmem:[#allocation8 + $0x8] sm:$0xff] %v531
    %v537 = vld [vmem:[#allocation2] sm:$0xff]
    %v538 = vld [vmem:[#allocation2 + $0x8] sm:$0xff]
    %v539 = vld [vmem:[#allocation2 + $0x10] sm:$0xff]
    %v540 = vld [vmem:[#allocation2 + $0x18] sm:$0xff]
    %v541 = vld [vmem:[#allocation2 + $0x20] sm:$0xff]
    %v542 = vld [vmem:[#allocation2 + $0x28] sm:$0xff]
    %v543 = vld [vmem:[#allocation2 + $0x30] sm:$0xff]
    %v544 = vld [vmem:[#allocation2 + $0x38] sm:$0xff]
    %v545 = vld [vmem:[#allocation2 + $0x40] sm:$0xff]
    %v546 = vld [vmem:[#allocation2 + $0x48] sm:$0xff]
    %v547 = vld [vmem:[#allocation2 + $0x50] sm:$0xff]
    %v548 = vld [vmem:[#allocation2 + $0x58] sm:$0xff]
    %v549 = vld [vmem:[#allocation2 + $0x60] sm:$0xff]
    %v550 = vld [vmem:[#allocation2 + $0x68] sm:$0xff]
    %v551 = vld [vmem:[#allocation2 + $0x70] sm:$0xff]
    %v552 = vld [vmem:[#allocation2 + $0x78] sm:$0xff]
    %v553 = vld [vmem:[%s2] sm:$0x3]
    %v555 = vlaneseq
    %v556 = vshrl.u32 %v555, 7
    %v557 = vsub.s32 0, %v556
    %v558 = vrot.slane %v553, %v557
    %v559 = vlaneseq
    %v560 = vshrl.u32 %v559, 7
    %v561 = vsub.s32 1, %v560
    %v562 = vrot.slane %v553, %v561
    %v581 = vunpack.c.l.b16 %v537
    %v582 = vunpack.c.h.b16 %v537
    %v583 = vunpack.c.l.b16 %v538
    %v584 = vunpack.c.h.b16 %v538
    %v585 = vunpack.c.l.b16 %v539
    %v586 = vunpack.c.h.b16 %v539
    %v587 = vunpack.c.l.b16 %v540
    %v588 = vunpack.c.h.b16 %v540
    %v589 = vunpack.c.l.b16 %v541
    %v590 = vunpack.c.h.b16 %v541
    %v591 = vunpack.c.l.b16 %v542
    %v592 = vunpack.c.h.b16 %v542
    %v593 = vunpack.c.l.b16 %v543
    %v594 = vunpack.c.h.b16 %v543
    %v595 = vunpack.c.l.b16 %v544
    %v596 = vunpack.c.h.b16 %v544
    %v597 = vunpack.c.l.b16 %v545
    %v598 = vunpack.c.h.b16 %v545
    %v599 = vunpack.c.l.b16 %v546
    %v600 = vunpack.c.h.b16 %v546
    %v601 = vunpack.c.l.b16 %v547
    %v602 = vunpack.c.h.b16 %v547
    %v603 = vunpack.c.l.b16 %v548
    %v604 = vunpack.c.h.b16 %v548
    %v605 = vunpack.c.l.b16 %v549
    %v606 = vunpack.c.h.b16 %v549
    %v607 = vunpack.c.l.b16 %v550
    %v608 = vunpack.c.h.b16 %v550
    %v609 = vunpack.c.l.b16 %v551
    %v610 = vunpack.c.h.b16 %v551
    %v611 = vunpack.c.l.b16 %v552
    %v612 = vunpack.c.h.b16 %v552
    %v613 = vpack.c.b16 %v583, %v581
    %v614 = vpack.c.b16 %v584, %v582
    %v615 = vpack.c.b16 %v587, %v585
    %v616 = vpack.c.b16 %v588, %v586
    %v617 = vpack.c.b16 %v591, %v589
    %v618 = vpack.c.b16 %v592, %v590
    %v619 = vpack.c.b16 %v595, %v593
    %v620 = vpack.c.b16 %v596, %v594
    %v621 = vpack.c.b16 %v599, %v597
    %v622 = vpack.c.b16 %v600, %v598
    %v623 = vpack.c.b16 %v603, %v601
    %v624 = vpack.c.b16 %v604, %v602
    %v625 = vpack.c.b16 %v607, %v605
    %v626 = vpack.c.b16 %v608, %v606
    %v627 = vpack.c.b16 %v611, %v609
    %v628 = vpack.c.b16 %v612, %v610
    %645 = vmatprep.subr.bf16.mxu0 %v614
    %646 = vmatpush1.bf16.msra.mxu0 %v613
    %647 = vmatprep.subr.bf16.mxu0 %v616
    %648 = vmatpush1.bf16.msra.mxu0 %v615
    %649 = vmatprep.subr.bf16.mxu0 %v618
    %650 = vmatpush1.bf16.msra.mxu0 %v617
    %651 = vmatprep.subr.bf16.mxu0 %v620
    %652 = vmatpush1.bf16.msra.mxu0 %v619
    %653 = vmatprep.subr.bf16.mxu0 %v622
    %654 = vmatpush1.bf16.msra.mxu0 %v621
    %655 = vmatprep.subr.bf16.mxu0 %v624
    %656 = vmatpush1.bf16.msra.mxu0 %v623
    %657 = vmatprep.subr.bf16.mxu0 %v626
    %658 = vmatpush1.bf16.msra.mxu0 %v625
    %659 = vmatprep.subr.bf16.mxu0 %v628
    %660 = vmatpush1.bf16.msra.mxu0 %v627
    %661 = vmatprep.subr.bf16.mxu0 0
    %662 = vmatpush1.bf16.msra.mxu0 0
    %663 = vmatprep.subr.bf16.mxu0 0
    %664 = vmatpush1.bf16.msra.mxu0 0
    %665 = vmatprep.subr.bf16.mxu0 0
    %666 = vmatpush1.bf16.msra.mxu0 0
    %667 = vmatprep.subr.bf16.mxu0 0
    %668 = vmatpush1.bf16.msra.mxu0 0
    %669 = vmatprep.subr.bf16.mxu0 0
    %670 = vmatpush1.bf16.msra.mxu0 0
    %671 = vmatprep.subr.bf16.mxu0 0
    %672 = vmatpush1.bf16.msra.mxu0 0
    %673 = vmatprep.subr.bf16.mxu0 0
    %674 = vmatpush1.bf16.msra.mxu0 0
    %675 = vmatprep.subr.bf16.mxu0 0
    %676 = vmatpush1.bf16.msra.mxu0 0
    %677 = vmatprep.mubr.bf16.mxu0 0
    %678 = vmatmul.mubr.bf16.gmra.mrb[0].mxu0 %v385
    %v679 = vpop.f32.mrb[0].mxu0
    %v680 = vadd.f32 %v558, %v679
    %v681 = vpop.f32.mrb[0].mxu0
    %v682 = vadd.f32 %v562, %v681
    %v683 = vpop.f32.mrb[0].mxu0
    %v684 = vpop.f32.mrb[0].mxu0
    %685 = vdwg.mxu0
    %v686 = vmax.f32 %v680, 0.0
    %687 = vmax.xlane.f32.xlu0 %v682
    %v688 = vpop.xlane.xlu0 %687
    %v689 = vsub.f32 %v682, %v688
    %v690 = vmul.f32 %v689, 1.442695
    %v691 = vpow.pop %v690
    %692 = vadd.xlane.f32.xlu0 %v691
    %v693 = vpop.xlane.xlu0 %692
    %v694 = vrcp.pop %v693
    %v695 = vmul.f32 %v691, %v694
    %v696 = vsub.f32 1.0, %v695
    %v697 = vmul.f32 %v696, %v383
    %v698 = vmul.f32 %v686, %v695
    %v699 = vadd.f32 %v697, %v698
    %v700 = vpack.c.bf16 %v699, %v699
    %v701 = vld [vmem:[%s219] sm:$0xff]
    %v702 = vld [vmem:[%s219 + $0x8] sm:$0xff]
    %v703 = vld [vmem:[%s219 + $0x10] sm:$0xff]
    %v704 = vld [vmem:[%s219 + $0x18] sm:$0xff]
    %v705 = vld [vmem:[%s219 + $0x20] sm:$0xff]
    %v706 = vld [vmem:[%s219 + $0x28] sm:$0xff]
    %v707 = vld [vmem:[%s219 + $0x30] sm:$0xff]
    %v708 = vld [vmem:[%s219 + $0x38] sm:$0xff]
    %v709 = vld [vmem:[%s219 + $0x40] sm:$0xff]
    %v710 = vld [vmem:[%s219 + $0x48] sm:$0xff]
    %v711 = vld [vmem:[%s219 + $0x50] sm:$0xff]
    %v712 = vld [vmem:[%s219 + $0x58] sm:$0xff]
    %v713 = vld [vmem:[%s219 + $0x60] sm:$0xff]
    %v714 = vld [vmem:[%s219 + $0x68] sm:$0xff]
    %v715 = vld [vmem:[%s219 + $0x70] sm:$0xff]
    %v716 = vld [vmem:[%s219 + $0x78] sm:$0xff]
    %v717 = vld [vmem:[%s236] sm:$0x3]
    %v719 = vlaneseq
    %v720 = vshrl.u32 %v719, 7
    %v721 = vsub.s32 0, %v720
    %v722 = vrot.slane %v717, %v721
    %v723 = vlaneseq
    %v724 = vshrl.u32 %v723, 7
    %v725 = vsub.s32 1, %v724
    %v726 = vrot.slane %v717, %v725
    %v745 = vunpack.c.l.b16 %v701
    %v746 = vunpack.c.h.b16 %v701
    %v747 = vunpack.c.l.b16 %v702
    %v748 = vunpack.c.h.b16 %v702
    %v749 = vunpack.c.l.b16 %v703
    %v750 = vunpack.c.h.b16 %v703
    %v751 = vunpack.c.l.b16 %v704
    %v752 = vunpack.c.h.b16 %v704
    %v753 = vunpack.c.l.b16 %v705
    %v754 = vunpack.c.h.b16 %v705
    %v755 = vunpack.c.l.b16 %v706
    %v756 = vunpack.c.h.b16 %v706
    %v757 = vunpack.c.l.b16 %v707
    %v758 = vunpack.c.h.b16 %v707
    %v759 = vunpack.c.l.b16 %v708
    %v760 = vunpack.c.h.b16 %v708
    %v761 = vunpack.c.l.b16 %v709
    %v762 = vunpack.c.h.b16 %v709
    %v763 = vunpack.c.l.b16 %v710
    %v764 = vunpack.c.h.b16 %v710
    %v765 = vunpack.c.l.b16 %v711
    %v766 = vunpack.c.h.b16 %v711
    %v767 = vunpack.c.l.b16 %v712
    %v768 = vunpack.c.h.b16 %v712
    %v769 = vunpack.c.l.b16 %v713
    %v770 = vunpack.c.h.b16 %v713
    %v771 = vunpack.c.l.b16 %v714
    %v772 = vunpack.c.h.b16 %v714
    %v773 = vunpack.c.l.b16 %v715
    %v774 = vunpack.c.h.b16 %v715
    %v775 = vunpack.c.l.b16 %v716
    %v776 = vunpack.c.h.b16 %v716
    %v777 = vpack.c.b16 %v747, %v745
    %v778 = vpack.c.b16 %v748, %v746
    %v779 = vpack.c.b16 %v751, %v749
    %v780 = vpack.c.b16 %v752, %v750
    %v781 = vpack.c.b16 %v755, %v753
    %v782 = vpack.c.b16 %v756, %v754
    %v783 = vpack.c.b16 %v759, %v757
    %v784 = vpack.c.b16 %v760, %v758
    %v785 = vpack.c.b16 %v763, %v761
    %v786 = vpack.c.b16 %v764, %v762
    %v787 = vpack.c.b16 %v767, %v765
    %v788 = vpack.c.b16 %v768, %v766
    %v789 = vpack.c.b16 %v771, %v769
    %v790 = vpack.c.b16 %v772, %v770
    %v791 = vpack.c.b16 %v775, %v773
    %v792 = vpack.c.b16 %v776, %v774
    %809 = vmatprep.subr.bf16.mxu0 %v778
    %810 = vmatpush1.bf16.msra.mxu0 %v777
    %811 = vmatprep.subr.bf16.mxu0 %v780
    %812 = vmatpush1.bf16.msra.mxu0 %v779
    %813 = vmatprep.subr.bf16.mxu0 %v782
    %814 = vmatpush1.bf16.msra.mxu0 %v781
    %815 = vmatprep.subr.bf16.mxu0 %v784
    %816 = vmatpush1.bf16.msra.mxu0 %v783
    %817 = vmatprep.subr.bf16.mxu0 %v786
    %818 = vmatpush1.bf16.msra.mxu0 %v785
    %819 = vmatprep.subr.bf16.mxu0 %v788
    %820 = vmatpush1.bf16.msra.mxu0 %v787
    %821 = vmatprep.subr.bf16.mxu0 %v790
    %822 = vmatpush1.bf16.msra.mxu0 %v789
    %823 = vmatprep.subr.bf16.mxu0 %v792
    %824 = vmatpush1.bf16.msra.mxu0 %v791
    %825 = vmatprep.subr.bf16.mxu0 0
    %826 = vmatpush1.bf16.msra.mxu0 0
    %827 = vmatprep.subr.bf16.mxu0 0
    %828 = vmatpush1.bf16.msra.mxu0 0
    %829 = vmatprep.subr.bf16.mxu0 0
    %830 = vmatpush1.bf16.msra.mxu0 0
    %831 = vmatprep.subr.bf16.mxu0 0
    %832 = vmatpush1.bf16.msra.mxu0 0
    %833 = vmatprep.subr.bf16.mxu0 0
    %834 = vmatpush1.bf16.msra.mxu0 0
    %835 = vmatprep.subr.bf16.mxu0 0
    %836 = vmatpush1.bf16.msra.mxu0 0
    %837 = vmatprep.subr.bf16.mxu0 0
    %838 = vmatpush1.bf16.msra.mxu0 0
    %839 = vmatprep.subr.bf16.mxu0 0
    %840 = vmatpush1.bf16.msra.mxu0 0
    %841 = vmatprep.mubr.bf16.mxu0 0
    %842 = vmatmul.mubr.bf16.gmra.mrb[0].mxu0 %v700
    %v843 = vpop.f32.mrb[0].mxu0
    %v844 = vadd.f32 %v722, %v843
    %v845 = vpop.f32.mrb[0].mxu0
    %v846 = vadd.f32 %v726, %v845
    %v847 = vpop.f32.mrb[0].mxu0
    %v848 = vpop.f32.mrb[0].mxu0
    %849 = vdwg.mxu0
    %v850 = vmax.f32 %v844, 0.0
    %851 = vmax.xlane.f32.xlu0 %v846
    %v852 = vpop.xlane.xlu0 %851
    %v853 = vsub.f32 %v846, %v852
    %v854 = vmul.f32 %v853, 1.442695
    %v855 = vpow.pop %v854
    %856 = vadd.xlane.f32.xlu0 %v855
    %v857 = vpop.xlane.xlu0 %856
    %v858 = vrcp.pop %v857
    %v859 = vmul.f32 %v855, %v858
    %v860 = vsub.f32 1.0, %v859
    %v861 = vmul.f32 %v860, %v699
    %v862 = vmul.f32 %v850, %v859
    %v863 = vadd.f32 %v861, %v862
    %s864 = scalar_lea.vmem [#allocation7], 8
    %865 = vst [vmem:[%s864] sm:$0xff] %v863
    %v866 = vpack.c.bf16 %v863, %v863
    %v867 = vld [vmem:[#allocation5] sm:$0xff]
    %v868 = vld [vmem:[#allocation5 + $0x8] sm:$0xff]
    %v869 = vld [vmem:[#allocation5 + $0x10] sm:$0xff]
    %v870 = vld [vmem:[#allocation5 + $0x18] sm:$0xff]
    %v871 = vld [vmem:[#allocation5 + $0x20] sm:$0xff]
    %v872 = vld [vmem:[#allocation5 + $0x28] sm:$0xff]
    %v873 = vld [vmem:[#allocation5 + $0x30] sm:$0xff]
    %v874 = vld [vmem:[#allocation5 + $0x38] sm:$0xff]
    %v875 = vld [vmem:[#allocation5 + $0x40] sm:$0xff]
    %v876 = vld [vmem:[#allocation5 + $0x48] sm:$0xff]
    %v877 = vld [vmem:[#allocation5 + $0x50] sm:$0xff]
    %v878 = vld [vmem:[#allocation5 + $0x58] sm:$0xff]
    %v879 = vld [vmem:[#allocation5 + $0x60] sm:$0xff]
    %v880 = vld [vmem:[#allocation5 + $0x68] sm:$0xff]
    %v881 = vld [vmem:[#allocation5 + $0x70] sm:$0xff]
    %v882 = vld [vmem:[#allocation5 + $0x78] sm:$0xff]
    %v883 = vld [vmem:[%s4] sm:$0x3]
    %v885 = vlaneseq
    %v886 = vshrl.u32 %v885, 7
    %v887 = vsub.s32 0, %v886
    %v888 = vrot.slane %v883, %v887
    %v889 = vlaneseq
    %v890 = vshrl.u32 %v889, 7
    %v891 = vsub.s32 1, %v890
    %v892 = vrot.slane %v883, %v891
    %v911 = vunpack.c.l.b16 %v867
    %v912 = vunpack.c.h.b16 %v867
    %v913 = vunpack.c.l.b16 %v868
    %v914 = vunpack.c.h.b16 %v868
    %v915 = vunpack.c.l.b16 %v869
    %v916 = vunpack.c.h.b16 %v869
    %v917 = vunpack.c.l.b16 %v870
    %v918 = vunpack.c.h.b16 %v870
    %v919 = vunpack.c.l.b16 %v871
    %v920 = vunpack.c.h.b16 %v871
    %v921 = vunpack.c.l.b16 %v872
    %v922 = vunpack.c.h.b16 %v872
    %v923 = vunpack.c.l.b16 %v873
    %v924 = vunpack.c.h.b16 %v873
    %v925 = vunpack.c.l.b16 %v874
    %v926 = vunpack.c.h.b16 %v874
    %v927 = vunpack.c.l.b16 %v875
    %v928 = vunpack.c.h.b16 %v875
    %v929 = vunpack.c.l.b16 %v876
    %v930 = vunpack.c.h.b16 %v876
    %v931 = vunpack.c.l.b16 %v877
    %v932 = vunpack.c.h.b16 %v877
    %v933 = vunpack.c.l.b16 %v878
    %v934 = vunpack.c.h.b16 %v878
    %v935 = vunpack.c.l.b16 %v879
    %v936 = vunpack.c.h.b16 %v879
    %v937 = vunpack.c.l.b16 %v880
    %v938 = vunpack.c.h.b16 %v880
    %v939 = vunpack.c.l.b16 %v881
    %v940 = vunpack.c.h.b16 %v881
    %v941 = vunpack.c.l.b16 %v882
    %v942 = vunpack.c.h.b16 %v882
    %v943 = vpack.c.b16 %v913, %v911
    %v944 = vpack.c.b16 %v914, %v912
    %v945 = vpack.c.b16 %v917, %v915
    %v946 = vpack.c.b16 %v918, %v916
    %v947 = vpack.c.b16 %v921, %v919
    %v948 = vpack.c.b16 %v922, %v920
    %v949 = vpack.c.b16 %v925, %v923
    %v950 = vpack.c.b16 %v926, %v924
    %v951 = vpack.c.b16 %v929, %v927
    %v952 = vpack.c.b16 %v930, %v928
    %v953 = vpack.c.b16 %v933, %v931
    %v954 = vpack.c.b16 %v934, %v932
    %v955 = vpack.c.b16 %v937, %v935
    %v956 = vpack.c.b16 %v938, %v936
    %v957 = vpack.c.b16 %v941, %v939
    %v958 = vpack.c.b16 %v942, %v940
    %975 = vmatprep.subr.bf16.mxu0 %v944
    %976 = vmatpush1.bf16.msra.mxu0 %v943
    %977 = vmatprep.subr.bf16.mxu0 %v946
    %978 = vmatpush1.bf16.msra.mxu0 %v945
    %979 = vmatprep.subr.bf16.mxu0 %v948
    %980 = vmatpush1.bf16.msra.mxu0 %v947
    %981 = vmatprep.subr.bf16.mxu0 %v950
    %982 = vmatpush1.bf16.msra.mxu0 %v949
    %983 = vmatprep.subr.bf16.mxu0 %v952
    %984 = vmatpush1.bf16.msra.mxu0 %v951
    %985 = vmatprep.subr.bf16.mxu0 %v954
    %986 = vmatpush1.bf16.msra.mxu0 %v953
    %987 = vmatprep.subr.bf16.mxu0 %v956
    %988 = vmatpush1.bf16.msra.mxu0 %v955
    %989 = vmatprep.subr.bf16.mxu0 %v958
    %990 = vmatpush1.bf16.msra.mxu0 %v957
    %991 = vmatprep.subr.bf16.mxu0 0
    %992 = vmatpush1.bf16.msra.mxu0 0
    %993 = vmatprep.subr.bf16.mxu0 0
    %994 = vmatpush1.bf16.msra.mxu0 0
    %995 = vmatprep.subr.bf16.mxu0 0
    %996 = vmatpush1.bf16.msra.mxu0 0
    %997 = vmatprep.subr.bf16.mxu0 0
    %998 = vmatpush1.bf16.msra.mxu0 0
    %999 = vmatprep.subr.bf16.mxu0 0
    %1000 = vmatpush1.bf16.msra.mxu0 0
    %1001 = vmatprep.subr.bf16.mxu0 0
    %1002 = vmatpush1.bf16.msra.mxu0 0
    %1003 = vmatprep.subr.bf16.mxu0 0
    %1004 = vmatpush1.bf16.msra.mxu0 0
    %1005 = vmatprep.subr.bf16.mxu0 0
    %1006 = vmatpush1.bf16.msra.mxu0 0
    %1007 = vmatprep.mubr.bf16.mxu0 0
    %1008 = vmatmul.mubr.bf16.gmra.mrb[0].mxu0 %v866
    %v1009 = vpop.f32.mrb[0].mxu0
    %v1010 = vadd.f32 %v888, %v1009
    %v1011 = vpop.f32.mrb[0].mxu0
    %v1012 = vadd.f32 %v892, %v1011
    %v1013 = vpop.f32.mrb[0].mxu0
    %v1014 = vpop.f32.mrb[0].mxu0
    %1015 = vdwg.mxu0
    %s1016 = scalar_lea.vmem [#allocation8], 16
    %1017 = vst [vmem:[%s1016] sm:$0xff] %v1010
    %1018 = vst [vmem:[%s1016 + $0x8] sm:$0xff] %v1012
    %v1019 = vld [vmem:[#allocation2] sm:$0xff]
    %v1020 = vld [vmem:[#allocation2 + $0x8] sm:$0xff]
    %v1021 = vld [vmem:[#allocation2 + $0x10] sm:$0xff]
    %v1022 = vld [vmem:[#allocation2 + $0x18] sm:$0xff]
    %v1023 = vld [vmem:[#allocation2 + $0x20] sm:$0xff]
    %v1024 = vld [vmem:[#allocation2 + $0x28] sm:$0xff]
    %v1025 = vld [vmem:[#allocation2 + $0x30] sm:$0xff]
    %v1026 = vld [vmem:[#allocation2 + $0x38] sm:$0xff]
    %v1027 = vld [vmem:[#allocation2 + $0x40] sm:$0xff]
    %v1028 = vld [vmem:[#allocation2 + $0x48] sm:$0xff]
    %v1029 = vld [vmem:[#allocation2 + $0x50] sm:$0xff]
    %v1030 = vld [vmem:[#allocation2 + $0x58] sm:$0xff]
    %v1031 = vld [vmem:[#allocation2 + $0x60] sm:$0xff]
    %v1032 = vld [vmem:[#allocation2 + $0x68] sm:$0xff]
    %v1033 = vld [vmem:[#allocation2 + $0x70] sm:$0xff]
    %v1034 = vld [vmem:[#allocation2 + $0x78] sm:$0xff]
    %v1035 = vld [vmem:[%s2] sm:$0x3]
    %v1037 = vlaneseq
    %v1038 = vshrl.u32 %v1037, 7
    %v1039 = vsub.s32 0, %v1038
    %v1040 = vrot.slane %v1035, %v1039
    %v1041 = vlaneseq
    %v1042 = vshrl.u32 %v1041, 7
    %v1043 = vsub.s32 1, %v1042
    %v1044 = vrot.slane %v1035, %v1043
    %v1063 = vunpack.c.l.b16 %v1019
    %v1064 = vunpack.c.h.b16 %v1019
    %v1065 = vunpack.c.l.b16 %v1020
    %v1066 = vunpack.c.h.b16 %v1020
    %v1067 = vunpack.c.l.b16 %v1021
    %v1068 = vunpack.c.h.b16 %v1021
    %v1069 = vunpack.c.l.b16 %v1022
    %v1070 = vunpack.c.h.b16 %v1022
    %v1071 = vunpack.c.l.b16 %v1023
    %v1072 = vunpack.c.h.b16 %v1023
    %v1073 = vunpack.c.l.b16 %v1024
    %v1074 = vunpack.c.h.b16 %v1024
    %v1075 = vunpack.c.l.b16 %v1025
    %v1076 = vunpack.c.h.b16 %v1025
    %v1077 = vunpack.c.l.b16 %v1026
    %v1078 = vunpack.c.h.b16 %v1026
    %v1079 = vunpack.c.l.b16 %v1027
    %v1080 = vunpack.c.h.b16 %v1027
    %v1081 = vunpack.c.l.b16 %v1028
    %v1082 = vunpack.c.h.b16 %v1028
    %v1083 = vunpack.c.l.b16 %v1029
    %v1084 = vunpack.c.h.b16 %v1029
    %v1085 = vunpack.c.l.b16 %v1030
    %v1086 = vunpack.c.h.b16 %v1030
    %v1087 = vunpack.c.l.b16 %v1031
    %v1088 = vunpack.c.h.b16 %v1031
    %v1089 = vunpack.c.l.b16 %v1032
    %v1090 = vunpack.c.h.b16 %v1032
    %v1091 = vunpack.c.l.b16 %v1033
    %v1092 = vunpack.c.h.b16 %v1033
    %v1093 = vunpack.c.l.b16 %v1034
    %v1094 = vunpack.c.h.b16 %v1034
    %v1095 = vpack.c.b16 %v1065, %v1063
    %v1096 = vpack.c.b16 %v1066, %v1064
    %v1097 = vpack.c.b16 %v1069, %v1067
    %v1098 = vpack.c.b16 %v1070, %v1068
    %v1099 = vpack.c.b16 %v1073, %v1071
    %v1100 = vpack.c.b16 %v1074, %v1072
    %v1101 = vpack.c.b16 %v1077, %v1075
    %v1102 = vpack.c.b16 %v1078, %v1076
    %v1103 = vpack.c.b16 %v1081, %v1079
    %v1104 = vpack.c.b16 %v1082, %v1080
    %v1105 = vpack.c.b16 %v1085, %v1083
    %v1106 = vpack.c.b16 %v1086, %v1084
    %v1107 = vpack.c.b16 %v1089, %v1087
    %v1108 = vpack.c.b16 %v1090, %v1088
    %v1109 = vpack.c.b16 %v1093, %v1091
    %v1110 = vpack.c.b16 %v1094, %v1092
    %1127 = vmatprep.subr.bf16.mxu0 %v1096
    %1128 = vmatpush1.bf16.msra.mxu0 %v1095
    %1129 = vmatprep.subr.bf16.mxu0 %v1098
    %1130 = vmatpush1.bf16.msra.mxu0 %v1097
    %1131 = vmatprep.subr.bf16.mxu0 %v1100
    %1132 = vmatpush1.bf16.msra.mxu0 %v1099
    %1133 = vmatprep.subr.bf16.mxu0 %v1102
    %1134 = vmatpush1.bf16.msra.mxu0 %v1101
    %1135 = vmatprep.subr.bf16.mxu0 %v1104
    %1136 = vmatpush1.bf16.msra.mxu0 %v1103
    %1137 = vmatprep.subr.bf16.mxu0 %v1106
    %1138 = vmatpush1.bf16.msra.mxu0 %v1105
    %1139 = vmatprep.subr.bf16.mxu0 %v1108
    %1140 = vmatpush1.bf16.msra.mxu0 %v1107
    %1141 = vmatprep.subr.bf16.mxu0 %v1110
    %1142 = vmatpush1.bf16.msra.mxu0 %v1109
    %1143 = vmatprep.subr.bf16.mxu0 0
    %1144 = vmatpush1.bf16.msra.mxu0 0
    %1145 = vmatprep.subr.bf16.mxu0 0
    %1146 = vmatpush1.bf16.msra.mxu0 0
    %1147 = vmatprep.subr.bf16.mxu0 0
    %1148 = vmatpush1.bf16.msra.mxu0 0
    %1149 = vmatprep.subr.bf16.mxu0 0
    %1150 = vmatpush1.bf16.msra.mxu0 0
    %1151 = vmatprep.subr.bf16.mxu0 0
    %1152 = vmatpush1.bf16.msra.mxu0 0
    %1153 = vmatprep.subr.bf16.mxu0 0
    %1154 = vmatpush1.bf16.msra.mxu0 0
    %1155 = vmatprep.subr.bf16.mxu0 0
    %1156 = vmatpush1.bf16.msra.mxu0 0
    %1157 = vmatprep.subr.bf16.mxu0 0
    %1158 = vmatpush1.bf16.msra.mxu0 0
    %1159 = vmatprep.mubr.bf16.mxu0 0
    %1160 = vmatmul.mubr.bf16.gmra.mrb[0].mxu0 %v866
    %v1161 = vpop.f32.mrb[0].mxu0
    %v1162 = vadd.f32 %v1040, %v1161
    %v1163 = vpop.f32.mrb[0].mxu0
    %v1164 = vadd.f32 %v1044, %v1163
    %v1165 = vpop.f32.mrb[0].mxu0
    %v1166 = vpop.f32.mrb[0].mxu0
    %1167 = vdwg.mxu0
    %v1168 = vmax.f32 %v1162, 0.0
    %1169 = vmax.xlane.f32.xlu0 %v1164
    %v1170 = vpop.xlane.xlu0 %1169
    %v1171 = vsub.f32 %v1164, %v1170
    %v1172 = vmul.f32 %v1171, 1.442695
    %v1173 = vpow.pop %v1172
    %1174 = vadd.xlane.f32.xlu0 %v1173
    %v1175 = vpop.xlane.xlu0 %1174
    %v1176 = vrcp.pop %v1175
    %v1177 = vmul.f32 %v1173, %v1176
    %v1178 = vsub.f32 1.0, %v1177
    %v1179 = vmul.f32 %v1178, %v863
    %v1180 = vmul.f32 %v1168, %v1177
    %v1181 = vadd.f32 %v1179, %v1180
    %v1182 = vpack.c.bf16 %v1181, %v1181
    %v1183 = vld [vmem:[%s219] sm:$0xff]
    %v1184 = vld [vmem:[%s219 + $0x8] sm:$0xff]
    %v1185 = vld [vmem:[%s219 + $0x10] sm:$0xff]
    %v1186 = vld [vmem:[%s219 + $0x18] sm:$0xff]
    %v1187 = vld [vmem:[%s219 + $0x20] sm:$0xff]
    %v1188 = vld [vmem:[%s219 + $0x28] sm:$0xff]
    %v1189 = vld [vmem:[%s219 + $0x30] sm:$0xff]
    %v1190 = vld [vmem:[%s219 + $0x38] sm:$0xff]
    %v1191 = vld [vmem:[%s219 + $0x40] sm:$0xff]
    %v1192 = vld [vmem:[%s219 + $0x48] sm:$0xff]
    %v1193 = vld [vmem:[%s219 + $0x50] sm:$0xff]
    %v1194 = vld [vmem:[%s219 + $0x58] sm:$0xff]
    %v1195 = vld [vmem:[%s219 + $0x60] sm:$0xff]
    %v1196 = vld [vmem:[%s219 + $0x68] sm:$0xff]
    %v1197 = vld [vmem:[%s219 + $0x70] sm:$0xff]
    %v1198 = vld [vmem:[%s219 + $0x78] sm:$0xff]
    %v1199 = vld [vmem:[%s236] sm:$0x3]
    %v1201 = vlaneseq
    %v1202 = vshrl.u32 %v1201, 7
    %v1203 = vsub.s32 0, %v1202
    %v1204 = vrot.slane %v1199, %v1203
    %v1205 = vlaneseq
    %v1206 = vshrl.u32 %v1205, 7
    %v1207 = vsub.s32 1, %v1206
    %v1208 = vrot.slane %v1199, %v1207
    %v1227 = vunpack.c.l.b16 %v1183
    %v1228 = vunpack.c.h.b16 %v1183
    %v1229 = vunpack.c.l.b16 %v1184
    %v1230 = vunpack.c.h.b16 %v1184
    %v1231 = vunpack.c.l.b16 %v1185
    %v1232 = vunpack.c.h.b16 %v1185
    %v1233 = vunpack.c.l.b16 %v1186
    %v1234 = vunpack.c.h.b16 %v1186
    %v1235 = vunpack.c.l.b16 %v1187
    %v1236 = vunpack.c.h.b16 %v1187
    %v1237 = vunpack.c.l.b16 %v1188
    %v1238 = vunpack.c.h.b16 %v1188
    %v1239 = vunpack.c.l.b16 %v1189
    %v1240 = vunpack.c.h.b16 %v1189
    %v1241 = vunpack.c.l.b16 %v1190
    %v1242 = vunpack.c.h.b16 %v1190
    %v1243 = vunpack.c.l.b16 %v1191
    %v1244 = vunpack.c.h.b16 %v1191
    %v1245 = vunpack.c.l.b16 %v1192
    %v1246 = vunpack.c.h.b16 %v1192
    %v1247 = vunpack.c.l.b16 %v1193
    %v1248 = vunpack.c.h.b16 %v1193
    %v1249 = vunpack.c.l.b16 %v1194
    %v1250 = vunpack.c.h.b16 %v1194
    %v1251 = vunpack.c.l.b16 %v1195
    %v1252 = vunpack.c.h.b16 %v1195
    %v1253 = vunpack.c.l.b16 %v1196
    %v1254 = vunpack.c.h.b16 %v1196
    %v1255 = vunpack.c.l.b16 %v1197
    %v1256 = vunpack.c.h.b16 %v1197
    %v1257 = vunpack.c.l.b16 %v1198
    %v1258 = vunpack.c.h.b16 %v1198
    %v1259 = vpack.c.b16 %v1229, %v1227
    %v1260 = vpack.c.b16 %v1230, %v1228
    %v1261 = vpack.c.b16 %v1233, %v1231
    %v1262 = vpack.c.b16 %v1234, %v1232
    %v1263 = vpack.c.b16 %v1237, %v1235
    %v1264 = vpack.c.b16 %v1238, %v1236
    %v1265 = vpack.c.b16 %v1241, %v1239
    %v1266 = vpack.c.b16 %v1242, %v1240
    %v1267 = vpack.c.b16 %v1245, %v1243
    %v1268 = vpack.c.b16 %v1246, %v1244
    %v1269 = vpack.c.b16 %v1249, %v1247
    %v1270 = vpack.c.b16 %v1250, %v1248
    %v1271 = vpack.c.b16 %v1253, %v1251
    %v1272 = vpack.c.b16 %v1254, %v1252
    %v1273 = vpack.c.b16 %v1257, %v1255
    %v1274 = vpack.c.b16 %v1258, %v1256
    %1291 = vmatprep.subr.bf16.mxu0 %v1260
    %1292 = vmatpush1.bf16.msra.mxu0 %v1259
    %1293 = vmatprep.subr.bf16.mxu0 %v1262
    %1294 = vmatpush1.bf16.msra.mxu0 %v1261
    %1295 = vmatprep.subr.bf16.mxu0 %v1264
    %1296 = vmatpush1.bf16.msra.mxu0 %v1263
    %1297 = vmatprep.subr.bf16.mxu0 %v1266
    %1298 = vmatpush1.bf16.msra.mxu0 %v1265
    %1299 = vmatprep.subr.bf16.mxu0 %v1268
    %1300 = vmatpush1.bf16.msra.mxu0 %v1267
    %1301 = vmatprep.subr.bf16.mxu0 %v1270
    %1302 = vmatpush1.bf16.msra.mxu0 %v1269
    %1303 = vmatprep.subr.bf16.mxu0 %v1272
    %1304 = vmatpush1.bf16.msra.mxu0 %v1271
    %1305 = vmatprep.subr.bf16.mxu0 %v1274
    %1306 = vmatpush1.bf16.msra.mxu0 %v1273
    %1307 = vmatprep.subr.bf16.mxu0 0
    %1308 = vmatpush1.bf16.msra.mxu0 0
    %1309 = vmatprep.subr.bf16.mxu0 0
    %1310 = vmatpush1.bf16.msra.mxu0 0
    %1311 = vmatprep.subr.bf16.mxu0 0
    %1312 = vmatpush1.bf16.msra.mxu0 0
    %1313 = vmatprep.subr.bf16.mxu0 0
    %1314 = vmatpush1.bf16.msra.mxu0 0
    %1315 = vmatprep.subr.bf16.mxu0 0
    %1316 = vmatpush1.bf16.msra.mxu0 0
    %1317 = vmatprep.subr.bf16.mxu0 0
    %1318 = vmatpush1.bf16.msra.mxu0 0
    %1319 = vmatprep.subr.bf16.mxu0 0
    %1320 = vmatpush1.bf16.msra.mxu0 0
    %1321 = vmatprep.subr.bf16.mxu0 0
    %1322 = vmatpush1.bf16.msra.mxu0 0
    %1323 = vmatprep.mubr.bf16.mxu0 0
    %1324 = vmatmul.mubr.bf16.gmra.mrb[0].mxu0 %v1182
    %v1325 = vpop.f32.mrb[0].mxu0
    %v1326 = vadd.f32 %v1204, %v1325
    %v1327 = vpop.f32.mrb[0].mxu0
    %v1328 = vadd.f32 %v1208, %v1327
    %v1329 = vpop.f32.mrb[0].mxu0
    %v1330 = vpop.f32.mrb[0].mxu0
    %1331 = vdwg.mxu0
    %v1332 = vmax.f32 %v1326, 0.0
    %1333 = vmax.xlane.f32.xlu0 %v1328
    %v1334 = vpop.xlane.xlu0 %1333
    %v1335 = vsub.f32 %v1328, %v1334
    %v1336 = vmul.f32 %v1335, 1.442695
    %v1337 = vpow.pop %v1336
    %1338 = vadd.xlane.f32.xlu0 %v1337
    %v1339 = vpop.xlane.xlu0 %1338
    %v1340 = vrcp.pop %v1339
    %v1341 = vmul.f32 %v1337, %v1340
    %v1342 = vsub.f32 1.0, %v1341
    %v1343 = vmul.f32 %v1342, %v1181
    %v1344 = vmul.f32 %v1332, %v1341
    %v1345 = vadd.f32 %v1343, %v1344
    %s1346 = scalar_lea.vmem [#allocation7], 16
    %1347 = vst [vmem:[%s1346] sm:$0xff] %v1345
    %v1348 = vpack.c.bf16 %v1345, %v1345
    %v1349 = vld [vmem:[#allocation5] sm:$0xff]
    %v1350 = vld [vmem:[#allocation5 + $0x8] sm:$0xff]
    %v1351 = vld [vmem:[#allocation5 + $0x10] sm:$0xff]
    %v1352 = vld [vmem:[#allocation5 + $0x18] sm:$0xff]
    %v1353 = vld [vmem:[#allocation5 + $0x20] sm:$0xff]
    %v1354 = vld [vmem:[#allocation5 + $0x28] sm:$0xff]
    %v1355 = vld [vmem:[#allocation5 + $0x30] sm:$0xff]
    %v1356 = vld [vmem:[#allocation5 + $0x38] sm:$0xff]
    %v1357 = vld [vmem:[#allocation5 + $0x40] sm:$0xff]
    %v1358 = vld [vmem:[#allocation5 + $0x48] sm:$0xff]
    %v1359 = vld [vmem:[#allocation5 + $0x50] sm:$0xff]
    %v1360 = vld [vmem:[#allocation5 + $0x58] sm:$0xff]
    %v1361 = vld [vmem:[#allocation5 + $0x60] sm:$0xff]
    %v1362 = vld [vmem:[#allocation5 + $0x68] sm:$0xff]
    %v1363 = vld [vmem:[#allocation5 + $0x70] sm:$0xff]
    %v1364 = vld [vmem:[#allocation5 + $0x78] sm:$0xff]
    %v1365 = vld [vmem:[%s4] sm:$0x3]
    %v1367 = vlaneseq
    %v1368 = vshrl.u32 %v1367, 7
    %v1369 = vsub.s32 0, %v1368
    %v1370 = vrot.slane %v1365, %v1369
    %v1371 = vlaneseq
    %v1372 = vshrl.u32 %v1371, 7
    %v1373 = vsub.s32 1, %v1372
    %v1374 = vrot.slane %v1365, %v1373
    %v1393 = vunpack.c.l.b16 %v1349
    %v1394 = vunpack.c.h.b16 %v1349
    %v1395 = vunpack.c.l.b16 %v1350
    %v1396 = vunpack.c.h.b16 %v1350
    %v1397 = vunpack.c.l.b16 %v1351
    %v1398 = vunpack.c.h.b16 %v1351
    %v1399 = vunpack.c.l.b16 %v1352
    %v1400 = vunpack.c.h.b16 %v1352
    %v1401 = vunpack.c.l.b16 %v1353
    %v1402 = vunpack.c.h.b16 %v1353
    %v1403 = vunpack.c.l.b16 %v1354
    %v1404 = vunpack.c.h.b16 %v1354
    %v1405 = vunpack.c.l.b16 %v1355
    %v1406 = vunpack.c.h.b16 %v1355
    %v1407 = vunpack.c.l.b16 %v1356
    %v1408 = vunpack.c.h.b16 %v1356
    %v1409 = vunpack.c.l.b16 %v1357
    %v1410 = vunpack.c.h.b16 %v1357
    %v1411 = vunpack.c.l.b16 %v1358
    %v1412 = vunpack.c.h.b16 %v1358
    %v1413 = vunpack.c.l.b16 %v1359
    %v1414 = vunpack.c.h.b16 %v1359
    %v1415 = vunpack.c.l.b16 %v1360
    %v1416 = vunpack.c.h.b16 %v1360
    %v1417 = vunpack.c.l.b16 %v1361
    %v1418 = vunpack.c.h.b16 %v1361
    %v1419 = vunpack.c.l.b16 %v1362
    %v1420 = vunpack.c.h.b16 %v1362
    %v1421 = vunpack.c.l.b16 %v1363
    %v1422 = vunpack.c.h.b16 %v1363
    %v1423 = vunpack.c.l.b16 %v1364
    %v1424 = vunpack.c.h.b16 %v1364
    %v1425 = vpack.c.b16 %v1395, %v1393
    %v1426 = vpack.c.b16 %v1396, %v1394
    %v1427 = vpack.c.b16 %v1399, %v1397
    %v1428 = vpack.c.b16 %v1400, %v1398
    %v1429 = vpack.c.b16 %v1403, %v1401
    %v1430 = vpack.c.b16 %v1404, %v1402
    %v1431 = vpack.c.b16 %v1407, %v1405
    %v1432 = vpack.c.b16 %v1408, %v1406
    %v1433 = vpack.c.b16 %v1411, %v1409
    %v1434 = vpack.c.b16 %v1412, %v1410
    %v1435 = vpack.c.b16 %v1415, %v1413
    %v1436 = vpack.c.b16 %v1416, %v1414
    %v1437 = vpack.c.b16 %v1419, %v1417
    %v1438 = vpack.c.b16 %v1420, %v1418
    %v1439 = vpack.c.b16 %v1423, %v1421
    %v1440 = vpack.c.b16 %v1424, %v1422
    %1457 = vmatprep.subr.bf16.mxu0 %v1426
    %1458 = vmatpush1.bf16.msra.mxu0 %v1425
    %1459 = vmatprep.subr.bf16.mxu0 %v1428
    %1460 = vmatpush1.bf16.msra.mxu0 %v1427
    %1461 = vmatprep.subr.bf16.mxu0 %v1430
    %1462 = vmatpush1.bf16.msra.mxu0 %v1429
    %1463 = vmatprep.subr.bf16.mxu0 %v1432
    %1464 = vmatpush1.bf16.msra.mxu0 %v1431
    %1465 = vmatprep.subr.bf16.mxu0 %v1434
    %1466 = vmatpush1.bf16.msra.mxu0 %v1433
    %1467 = vmatprep.subr.bf16.mxu0 %v1436
    %1468 = vmatpush1.bf16.msra.mxu0 %v1435
    %1469 = vmatprep.subr.bf16.mxu0 %v1438
    %1470 = vmatpush1.bf16.msra.mxu0 %v1437
    %1471 = vmatprep.subr.bf16.mxu0 %v1440
    %1472 = vmatpush1.bf16.msra.mxu0 %v1439
    %1473 = vmatprep.subr.bf16.mxu0 0
    %1474 = vmatpush1.bf16.msra.mxu0 0
    %1475 = vmatprep.subr.bf16.mxu0 0
    %1476 = vmatpush1.bf16.msra.mxu0 0
    %1477 = vmatprep.subr.bf16.mxu0 0
    %1478 = vmatpush1.bf16.msra.mxu0 0
    %1479 = vmatprep.subr.bf16.mxu0 0
    %1480 = vmatpush1.bf16.msra.mxu0 0
    %1481 = vmatprep.subr.bf16.mxu0 0
    %1482 = vmatpush1.bf16.msra.mxu0 0
    %1483 = vmatprep.subr.bf16.mxu0 0
    %1484 = vmatpush1.bf16.msra.mxu0 0
    %1485 = vmatprep.subr.bf16.mxu0 0
    %1486 = vmatpush1.bf16.msra.mxu0 0
    %1487 = vmatprep.subr.bf16.mxu0 0
    %1488 = vmatpush1.bf16.msra.mxu0 0
    %1489 = vmatprep.mubr.bf16.mxu0 0
    %1490 = vmatmul.mubr.bf16.gmra.mrb[0].mxu0 %v1348
    %v1491 = vpop.f32.mrb[0].mxu0
    %v1492 = vadd.f32 %v1370, %v1491
    %v1493 = vpop.f32.mrb[0].mxu0
    %v1494 = vadd.f32 %v1374, %v1493
    %v1495 = vpop.f32.mrb[0].mxu0
    %v1496 = vpop.f32.mrb[0].mxu0
    %1497 = vdwg.mxu0
    %s1498 = scalar_lea.vmem [#allocation8], 32
    %1499 = vst [vmem:[%s1498] sm:$0xff] %v1492
    %1500 = vst [vmem:[%s1498 + $0x8] sm:$0xff] %v1494
    %v1501 = vld [vmem:[#allocation2] sm:$0xff]
    %v1502 = vld [vmem:[#allocation2 + $0x8] sm:$0xff]
    %v1503 = vld [vmem:[#allocation2 + $0x10] sm:$0xff]
    %v1504 = vld [vmem:[#allocation2 + $0x18] sm:$0xff]
    %v1505 = vld [vmem:[#allocation2 + $0x20] sm:$0xff]
    %v1506 = vld [vmem:[#allocation2 + $0x28] sm:$0xff]
    %v1507 = vld [vmem:[#allocation2 + $0x30] sm:$0xff]
    %v1508 = vld [vmem:[#allocation2 + $0x38] sm:$0xff]
    %v1509 = vld [vmem:[#allocation2 + $0x40] sm:$0xff]
    %v1510 = vld [vmem:[#allocation2 + $0x48] sm:$0xff]
    %v1511 = vld [vmem:[#allocation2 + $0x50] sm:$0xff]
    %v1512 = vld [vmem:[#allocation2 + $0x58] sm:$0xff]
    %v1513 = vld [vmem:[#allocation2 + $0x60] sm:$0xff]
    %v1514 = vld [vmem:[#allocation2 + $0x68] sm:$0xff]
    %v1515 = vld [vmem:[#allocation2 + $0x70] sm:$0xff]
    %v1516 = vld [vmem:[#allocation2 + $0x78] sm:$0xff]
    %v1517 = vld [vmem:[%s2] sm:$0x3]
    %v1519 = vlaneseq
    %v1520 = vshrl.u32 %v1519, 7
    %v1521 = vsub.s32 0, %v1520
    %v1522 = vrot.slane %v1517, %v1521
    %v1523 = vlaneseq
    %v1524 = vshrl.u32 %v1523, 7
    %v1525 = vsub.s32 1, %v1524
    %v1526 = vrot.slane %v1517, %v1525
    %v1545 = vunpack.c.l.b16 %v1501
    %v1546 = vunpack.c.h.b16 %v1501
    %v1547 = vunpack.c.l.b16 %v1502
    %v1548 = vunpack.c.h.b16 %v1502
    %v1549 = vunpack.c.l.b16 %v1503
    %v1550 = vunpack.c.h.b16 %v1503
    %v1551 = vunpack.c.l.b16 %v1504
    %v1552 = vunpack.c.h.b16 %v1504
    %v1553 = vunpack.c.l.b16 %v1505
    %v1554 = vunpack.c.h.b16 %v1505
    %v1555 = vunpack.c.l.b16 %v1506
    %v1556 = vunpack.c.h.b16 %v1506
    %v1557 = vunpack.c.l.b16 %v1507
    %v1558 = vunpack.c.h.b16 %v1507
    %v1559 = vunpack.c.l.b16 %v1508
    %v1560 = vunpack.c.h.b16 %v1508
    %v1561 = vunpack.c.l.b16 %v1509
    %v1562 = vunpack.c.h.b16 %v1509
    %v1563 = vunpack.c.l.b16 %v1510
    %v1564 = vunpack.c.h.b16 %v1510
    %v1565 = vunpack.c.l.b16 %v1511
    %v1566 = vunpack.c.h.b16 %v1511
    %v1567 = vunpack.c.l.b16 %v1512
    %v1568 = vunpack.c.h.b16 %v1512
    %v1569 = vunpack.c.l.b16 %v1513
    %v1570 = vunpack.c.h.b16 %v1513
    %v1571 = vunpack.c.l.b16 %v1514
    %v1572 = vunpack.c.h.b16 %v1514
    %v1573 = vunpack.c.l.b16 %v1515
    %v1574 = vunpack.c.h.b16 %v1515
    %v1575 = vunpack.c.l.b16 %v1516
    %v1576 = vunpack.c.h.b16 %v1516
    %v1577 = vpack.c.b16 %v1547, %v1545
    %v1578 = vpack.c.b16 %v1548, %v1546
    %v1579 = vpack.c.b16 %v1551, %v1549
    %v1580 = vpack.c.b16 %v1552, %v1550
    %v1581 = vpack.c.b16 %v1555, %v1553
    %v1582 = vpack.c.b16 %v1556, %v1554
    %v1583 = vpack.c.b16 %v1559, %v1557
    %v1584 = vpack.c.b16 %v1560, %v1558
    %v1585 = vpack.c.b16 %v1563, %v1561
    %v1586 = vpack.c.b16 %v1564, %v1562
    %v1587 = vpack.c.b16 %v1567, %v1565
    %v1588 = vpack.c.b16 %v1568, %v1566
    %v1589 = vpack.c.b16 %v1571, %v1569
    %v1590 = vpack.c.b16 %v1572, %v1570
    %v1591 = vpack.c.b16 %v1575, %v1573
    %v1592 = vpack.c.b16 %v1576, %v1574
    %1609 = vmatprep.subr.bf16.mxu0 %v1578
    %1610 = vmatpush1.bf16.msra.mxu0 %v1577
    %1611 = vmatprep.subr.bf16.mxu0 %v1580
    %1612 = vmatpush1.bf16.msra.mxu0 %v1579
    %1613 = vmatprep.subr.bf16.mxu0 %v1582
    %1614 = vmatpush1.bf16.msra.mxu0 %v1581
    %1615 = vmatprep.subr.bf16.mxu0 %v1584
    %1616 = vmatpush1.bf16.msra.mxu0 %v1583
    %1617 = vmatprep.subr.bf16.mxu0 %v1586
    %1618 = vmatpush1.bf16.msra.mxu0 %v1585
    %1619 = vmatprep.subr.bf16.mxu0 %v1588
    %1620 = vmatpush1.bf16.msra.mxu0 %v1587
    %1621 = vmatprep.subr.bf16.mxu0 %v1590
    %1622 = vmatpush1.bf16.msra.mxu0 %v1589
    %1623 = vmatprep.subr.bf16.mxu0 %v1592
    %1624 = vmatpush1.bf16.msra.mxu0 %v1591
    %1625 = vmatprep.subr.bf16.mxu0 0
    %1626 = vmatpush1.bf16.msra.mxu0 0
    %1627 = vmatprep.subr.bf16.mxu0 0
    %1628 = vmatpush1.bf16.msra.mxu0 0
    %1629 = vmatprep.subr.bf16.mxu0 0
    %1630 = vmatpush1.bf16.msra.mxu0 0
    %1631 = vmatprep.subr.bf16.mxu0 0
    %1632 = vmatpush1.bf16.msra.mxu0 0
    %1633 = vmatprep.subr.bf16.mxu0 0
    %1634 = vmatpush1.bf16.msra.mxu0 0
    %1635 = vmatprep.subr.bf16.mxu0 0
    %1636 = vmatpush1.bf16.msra.mxu0 0
    %1637 = vmatprep.subr.bf16.mxu0 0
    %1638 = vmatpush1.bf16.msra.mxu0 0
    %1639 = vmatprep.subr.bf16.mxu0 0
    %1640 = vmatpush1.bf16.msra.mxu0 0
    %1641 = vmatprep.mubr.bf16.mxu0 0
    %1642 = vmatmul.mubr.bf16.gmra.mrb[0].mxu0 %v1348
    %v1643 = vpop.f32.mrb[0].mxu0
    %v1644 = vadd.f32 %v1522, %v1643
    %v1645 = vpop.f32.mrb[0].mxu0
    %v1646 = vadd.f32 %v1526, %v1645
    %v1647 = vpop.f32.mrb[0].mxu0
    %v1648 = vpop.f32.mrb[0].mxu0
    %1649 = vdwg.mxu0
    %v1650 = vmax.f32 %v1644, 0.0
    %1651 = vmax.xlane.f32.xlu0 %v1646
    %v1652 = vpop.xlane.xlu0 %1651
    %v1653 = vsub.f32 %v1646, %v1652
    %v1654 = vmul.f32 %v1653, 1.442695
    %v1655 = vpow.pop %v1654
    %1656 = vadd.xlane.f32.xlu0 %v1655
    %v1657 = vpop.xlane.xlu0 %1656
    %v1658 = vrcp.pop %v1657
    %v1659 = vmul.f32 %v1655, %v1658
    %v1660 = vsub.f32 1.0, %v1659
    %v1661 = vmul.f32 %v1660, %v1345
    %v1662 = vmul.f32 %v1650, %v1659
    %v1663 = vadd.f32 %v1661, %v1662
    %v1664 = vpack.c.bf16 %v1663, %v1663
    %v1665 = vld [vmem:[%s219] sm:$0xff]
    %v1666 = vld [vmem:[%s219 + $0x8] sm:$0xff]
    %v1667 = vld [vmem:[%s219 + $0x10] sm:$0xff]
    %v1668 = vld [vmem:[%s219 + $0x18] sm:$0xff]
    %v1669 = vld [vmem:[%s219 + $0x20] sm:$0xff]
    %v1670 = vld [vmem:[%s219 + $0x28] sm:$0xff]
    %v1671 = vld [vmem:[%s219 + $0x30] sm:$0xff]
    %v1672 = vld [vmem:[%s219 + $0x38] sm:$0xff]
    %v1673 = vld [vmem:[%s219 + $0x40] sm:$0xff]
    %v1674 = vld [vmem:[%s219 + $0x48] sm:$0xff]
    %v1675 = vld [vmem:[%s219 + $0x50] sm:$0xff]
    %v1676 = vld [vmem:[%s219 + $0x58] sm:$0xff]
    %v1677 = vld [vmem:[%s219 + $0x60] sm:$0xff]
    %v1678 = vld [vmem:[%s219 + $0x68] sm:$0xff]
    %v1679 = vld [vmem:[%s219 + $0x70] sm:$0xff]
    %v1680 = vld [vmem:[%s219 + $0x78] sm:$0xff]
    %v1681 = vld [vmem:[%s236] sm:$0x3]
    %v1683 = vlaneseq
    %v1684 = vshrl.u32 %v1683, 7
    %v1685 = vsub.s32 0, %v1684
    %v1686 = vrot.slane %v1681, %v1685
    %v1687 = vlaneseq
    %v1688 = vshrl.u32 %v1687, 7
    %v1689 = vsub.s32 1, %v1688
    %v1690 = vrot.slane %v1681, %v1689
    %v1709 = vunpack.c.l.b16 %v1665
    %v1710 = vunpack.c.h.b16 %v1665
    %v1711 = vunpack.c.l.b16 %v1666
    %v1712 = vunpack.c.h.b16 %v1666
    %v1713 = vunpack.c.l.b16 %v1667
    %v1714 = vunpack.c.h.b16 %v1667
    %v1715 = vunpack.c.l.b16 %v1668
    %v1716 = vunpack.c.h.b16 %v1668
    %v1717 = vunpack.c.l.b16 %v1669
    %v1718 = vunpack.c.h.b16 %v1669
    %v1719 = vunpack.c.l.b16 %v1670
    %v1720 = vunpack.c.h.b16 %v1670
    %v1721 = vunpack.c.l.b16 %v1671
    %v1722 = vunpack.c.h.b16 %v1671
    %v1723 = vunpack.c.l.b16 %v1672
    %v1724 = vunpack.c.h.b16 %v1672
    %v1725 = vunpack.c.l.b16 %v1673
    %v1726 = vunpack.c.h.b16 %v1673
    %v1727 = vunpack.c.l.b16 %v1674
    %v1728 = vunpack.c.h.b16 %v1674
    %v1729 = vunpack.c.l.b16 %v1675
    %v1730 = vunpack.c.h.b16 %v1675
    %v1731 = vunpack.c.l.b16 %v1676
    %v1732 = vunpack.c.h.b16 %v1676
    %v1733 = vunpack.c.l.b16 %v1677
    %v1734 = vunpack.c.h.b16 %v1677
    %v1735 = vunpack.c.l.b16 %v1678
    %v1736 = vunpack.c.h.b16 %v1678
    %v1737 = vunpack.c.l.b16 %v1679
    %v1738 = vunpack.c.h.b16 %v1679
    %v1739 = vunpack.c.l.b16 %v1680
    %v1740 = vunpack.c.h.b16 %v1680
    %v1741 = vpack.c.b16 %v1711, %v1709
    %v1742 = vpack.c.b16 %v1712, %v1710
    %v1743 = vpack.c.b16 %v1715, %v1713
    %v1744 = vpack.c.b16 %v1716, %v1714
    %v1745 = vpack.c.b16 %v1719, %v1717
    %v1746 = vpack.c.b16 %v1720, %v1718
    %v1747 = vpack.c.b16 %v1723, %v1721
    %v1748 = vpack.c.b16 %v1724, %v1722
    %v1749 = vpack.c.b16 %v1727, %v1725
    %v1750 = vpack.c.b16 %v1728, %v1726
    %v1751 = vpack.c.b16 %v1731, %v1729
    %v1752 = vpack.c.b16 %v1732, %v1730
    %v1753 = vpack.c.b16 %v1735, %v1733
    %v1754 = vpack.c.b16 %v1736, %v1734
    %v1755 = vpack.c.b16 %v1739, %v1737
    %v1756 = vpack.c.b16 %v1740, %v1738
    %1773 = vmatprep.subr.bf16.mxu0 %v1742
    %1774 = vmatpush1.bf16.msra.mxu0 %v1741
    %1775 = vmatprep.subr.bf16.mxu0 %v1744
    %1776 = vmatpush1.bf16.msra.mxu0 %v1743
    %1777 = vmatprep.subr.bf16.mxu0 %v1746
    %1778 = vmatpush1.bf16.msra.mxu0 %v1745
    %1779 = vmatprep.subr.bf16.mxu0 %v1748
    %1780 = vmatpush1.bf16.msra.mxu0 %v1747
    %1781 = vmatprep.subr.bf16.mxu0 %v1750
    %1782 = vmatpush1.bf16.msra.mxu0 %v1749
    %1783 = vmatprep.subr.bf16.mxu0 %v1752
    %1784 = vmatpush1.bf16.msra.mxu0 %v1751
    %1785 = vmatprep.subr.bf16.mxu0 %v1754
    %1786 = vmatpush1.bf16.msra.mxu0 %v1753
    %1787 = vmatprep.subr.bf16.mxu0 %v1756
    %1788 = vmatpush1.bf16.msra.mxu0 %v1755
    %1789 = vmatprep.subr.bf16.mxu0 0
    %1790 = vmatpush1.bf16.msra.mxu0 0
    %1791 = vmatprep.subr.bf16.mxu0 0
    %1792 = vmatpush1.bf16.msra.mxu0 0
    %1793 = vmatprep.subr.bf16.mxu0 0
    %1794 = vmatpush1.bf16.msra.mxu0 0
    %1795 = vmatprep.subr.bf16.mxu0 0
    %1796 = vmatpush1.bf16.msra.mxu0 0
    %1797 = vmatprep.subr.bf16.mxu0 0
    %1798 = vmatpush1.bf16.msra.mxu0 0
    %1799 = vmatprep.subr.bf16.mxu0 0
    %1800 = vmatpush1.bf16.msra.mxu0 0
    %1801 = vmatprep.subr.bf16.mxu0 0
    %1802 = vmatpush1.bf16.msra.mxu0 0
    %1803 = vmatprep.subr.bf16.mxu0 0
    %1804 = vmatpush1.bf16.msra.mxu0 0
    %1805 = vmatprep.mubr.bf16.mxu0 0
    %1806 = vmatmul.mubr.bf16.gmra.mrb[0].mxu0 %v1664
    %v1807 = vpop.f32.mrb[0].mxu0
    %v1808 = vadd.f32 %v1686, %v1807
    %v1809 = vpop.f32.mrb[0].mxu0
    %v1810 = vadd.f32 %v1690, %v1809
    %v1811 = vpop.f32.mrb[0].mxu0
    %v1812 = vpop.f32.mrb[0].mxu0
    %1813 = vdwg.mxu0
    %v1814 = vmax.f32 %v1808, 0.0
    %1815 = vmax.xlane.f32.xlu0 %v1810
    %v1816 = vpop.xlane.xlu0 %1815
    %v1817 = vsub.f32 %v1810, %v1816
    %v1818 = vmul.f32 %v1817, 1.442695
    %v1819 = vpow.pop %v1818
    %1820 = vadd.xlane.f32.xlu0 %v1819
    %v1821 = vpop.xlane.xlu0 %1820
    %v1822 = vrcp.pop %v1821
    %v1823 = vmul.f32 %v1819, %v1822
    %v1824 = vsub.f32 1.0, %v1823
    %v1825 = vmul.f32 %v1824, %v1663
    %v1826 = vmul.f32 %v1814, %v1823
    %v1827 = vadd.f32 %v1825, %v1826
    %s1828 = scalar_lea.vmem [#allocation7], 24
    %1829 = vst [vmem:[%s1828] sm:$0xff] %v1827
    %v1830 = vpack.c.bf16 %v1827, %v1827
    %v1831 = vld [vmem:[#allocation5] sm:$0xff]
    %v1832 = vld [vmem:[#allocation5 + $0x8] sm:$0xff]
    %v1833 = vld [vmem:[#allocation5 + $0x10] sm:$0xff]
    %v1834 = vld [vmem:[#allocation5 + $0x18] sm:$0xff]
    %v1835 = vld [vmem:[#allocation5 + $0x20] sm:$0xff]
    %v1836 = vld [vmem:[#allocation5 + $0x28] sm:$0xff]
    %v1837 = vld [vmem:[#allocation5 + $0x30] sm:$0xff]
    %v1838 = vld [vmem:[#allocation5 + $0x38] sm:$0xff]
    %v1839 = vld [vmem:[#allocation5 + $0x40] sm:$0xff]
    %v1840 = vld [vmem:[#allocation5 + $0x48] sm:$0xff]
    %v1841 = vld [vmem:[#allocation5 + $0x50] sm:$0xff]
    %v1842 = vld [vmem:[#allocation5 + $0x58] sm:$0xff]
    %v1843 = vld [vmem:[#allocation5 + $0x60] sm:$0xff]
    %v1844 = vld [vmem:[#allocation5 + $0x68] sm:$0xff]
    %v1845 = vld [vmem:[#allocation5 + $0x70] sm:$0xff]
    %v1846 = vld [vmem:[#allocation5 + $0x78] sm:$0xff]
    %v1847 = vld [vmem:[%s4] sm:$0x3]
    %v1849 = vlaneseq
    %v1850 = vshrl.u32 %v1849, 7
    %v1851 = vsub.s32 0, %v1850
    %v1852 = vrot.slane %v1847, %v1851
    %v1853 = vlaneseq
    %v1854 = vshrl.u32 %v1853, 7
    %v1855 = vsub.s32 1, %v1854
    %v1856 = vrot.slane %v1847, %v1855
    %v1875 = vunpack.c.l.b16 %v1831
    %v1876 = vunpack.c.h.b16 %v1831
    %v1877 = vunpack.c.l.b16 %v1832
    %v1878 = vunpack.c.h.b16 %v1832
    %v1879 = vunpack.c.l.b16 %v1833
    %v1880 = vunpack.c.h.b16 %v1833
    %v1881 = vunpack.c.l.b16 %v1834
    %v1882 = vunpack.c.h.b16 %v1834
    %v1883 = vunpack.c.l.b16 %v1835
    %v1884 = vunpack.c.h.b16 %v1835
    %v1885 = vunpack.c.l.b16 %v1836
    %v1886 = vunpack.c.h.b16 %v1836
    %v1887 = vunpack.c.l.b16 %v1837
    %v1888 = vunpack.c.h.b16 %v1837
    %v1889 = vunpack.c.l.b16 %v1838
    %v1890 = vunpack.c.h.b16 %v1838
    %v1891 = vunpack.c.l.b16 %v1839
    %v1892 = vunpack.c.h.b16 %v1839
    %v1893 = vunpack.c.l.b16 %v1840
    %v1894 = vunpack.c.h.b16 %v1840
    %v1895 = vunpack.c.l.b16 %v1841
    %v1896 = vunpack.c.h.b16 %v1841
    %v1897 = vunpack.c.l.b16 %v1842
    %v1898 = vunpack.c.h.b16 %v1842
    %v1899 = vunpack.c.l.b16 %v1843
    %v1900 = vunpack.c.h.b16 %v1843
    %v1901 = vunpack.c.l.b16 %v1844
    %v1902 = vunpack.c.h.b16 %v1844
    %v1903 = vunpack.c.l.b16 %v1845
    %v1904 = vunpack.c.h.b16 %v1845
    %v1905 = vunpack.c.l.b16 %v1846
    %v1906 = vunpack.c.h.b16 %v1846
    %v1907 = vpack.c.b16 %v1877, %v1875
    %v1908 = vpack.c.b16 %v1878, %v1876
    %v1909 = vpack.c.b16 %v1881, %v1879
    %v1910 = vpack.c.b16 %v1882, %v1880
    %v1911 = vpack.c.b16 %v1885, %v1883
    %v1912 = vpack.c.b16 %v1886, %v1884
    %v1913 = vpack.c.b16 %v1889, %v1887
    %v1914 = vpack.c.b16 %v1890, %v1888
    %v1915 = vpack.c.b16 %v1893, %v1891
    %v1916 = vpack.c.b16 %v1894, %v1892
    %v1917 = vpack.c.b16 %v1897, %v1895
    %v1918 = vpack.c.b16 %v1898, %v1896
    %v1919 = vpack.c.b16 %v1901, %v1899
    %v1920 = vpack.c.b16 %v1902, %v1900
    %v1921 = vpack.c.b16 %v1905, %v1903
    %v1922 = vpack.c.b16 %v1906, %v1904
    %1939 = vmatprep.subr.bf16.mxu0 %v1908
    %1940 = vmatpush1.bf16.msra.mxu0 %v1907
    %1941 = vmatprep.subr.bf16.mxu0 %v1910
    %1942 = vmatpush1.bf16.msra.mxu0 %v1909
    %1943 = vmatprep.subr.bf16.mxu0 %v1912
    %1944 = vmatpush1.bf16.msra.mxu0 %v1911
    %1945 = vmatprep.subr.bf16.mxu0 %v1914
    %1946 = vmatpush1.bf16.msra.mxu0 %v1913
    %1947 = vmatprep.subr.bf16.mxu0 %v1916
    %1948 = vmatpush1.bf16.msra.mxu0 %v1915
    %1949 = vmatprep.subr.bf16.mxu0 %v1918
    %1950 = vmatpush1.bf16.msra.mxu0 %v1917
    %1951 = vmatprep.subr.bf16.mxu0 %v1920
    %1952 = vmatpush1.bf16.msra.mxu0 %v1919
    %1953 = vmatprep.subr.bf16.mxu0 %v1922
    %1954 = vmatpush1.bf16.msra.mxu0 %v1921
    %1955 = vmatprep.subr.bf16.mxu0 0
    %1956 = vmatpush1.bf16.msra.mxu0 0
    %1957 = vmatprep.subr.bf16.mxu0 0
    %1958 = vmatpush1.bf16.msra.mxu0 0
    %1959 = vmatprep.subr.bf16.mxu0 0
    %1960 = vmatpush1.bf16.msra.mxu0 0
    %1961 = vmatprep.subr.bf16.mxu0 0
    %1962 = vmatpush1.bf16.msra.mxu0 0
    %1963 = vmatprep.subr.bf16.mxu0 0
    %1964 = vmatpush1.bf16.msra.mxu0 0
    %1965 = vmatprep.subr.bf16.mxu0 0
    %1966 = vmatpush1.bf16.msra.mxu0 0
    %1967 = vmatprep.subr.bf16.mxu0 0
    %1968 = vmatpush1.bf16.msra.mxu0 0
    %1969 = vmatprep.subr.bf16.mxu0 0
    %1970 = vmatpush1.bf16.msra.mxu0 0
    %1971 = vmatprep.mubr.bf16.mxu0 0
    %1972 = vmatmul.mubr.bf16.gmra.mrb[0].mxu0 %v1830
    %v1973 = vpop.f32.mrb[0].mxu0
    %v1974 = vadd.f32 %v1852, %v1973
    %v1975 = vpop.f32.mrb[0].mxu0
    %v1976 = vadd.f32 %v1856, %v1975
    %v1977 = vpop.f32.mrb[0].mxu0
    %v1978 = vpop.f32.mrb[0].mxu0
    %1979 = vdwg.mxu0
    %s1980 = scalar_lea.vmem [#allocation8], 48
    %1981 = vst [vmem:[%s1980] sm:$0xff] %v1974
    %1982 = vst [vmem:[%s1980 + $0x8] sm:$0xff] %v1976
    // Predicated region
    $region30: #{language_model_forward.1} parent=1 // pred_check
      _
    $region31: #{language_model_forward.1} parent=1 // pred_check_branch
      %1984 = sbr.rel (0) target = $region33
    $region32: #{language_model_forward.1} parent=1 // pred_region
      %s1986 = ssub.s32 512, 512
      %1987 = vsyncadd [#allocation4], %s1986
      %s1988 = sshll.u32 [#allocation7], 4
      %s1989 = int_to_ptr.vmem [resolvable:$true] %s1988
      %1994 = dma.vmem_to_hbm [thread:$0]  %s1989, 512, %s5, [#allocation4], 128, 128, 8
    $region33: #{language_model_forward.1} parent=1 // pred_fallthru
      _
    // Predicated region
    $region34: #{language_model_forward.1} parent=1 // pred_check
      _
    $region35: #{language_model_forward.1} parent=1 // pred_check_branch
      %1996 = sbr.rel (0) target = $region37
    $region36: #{language_model_forward.1} parent=1 // pred_region
      %s1998 = ssub.s32 1024, 1024
      %1999 = vsyncadd [#allocation9], %s1998
      %s2000 = sshll.u32 [#allocation8], 4
      %s2001 = int_to_ptr.vmem [resolvable:$true] %s2000
      %2006 = dma.vmem_to_hbm [thread:$0]  %s2001, 1024, %s6, [#allocation9], 256, 256, 16
    $region37: #{language_model_forward.1} parent=1 // pred_fallthru
      _
    // Predicated region
    $region38: #{language_model_forward.1} parent=1 // pred_check
      _
    $region39: #{language_model_forward.1} parent=1 // pred_check_branch
      %2008 = sbr.rel (0) target = $region41
    $region40: #{language_model_forward.1} parent=1 // pred_region
      %2009 = dma.done [#allocation4], 512
    $region41: #{language_model_forward.1} parent=1 // pred_fallthru
      _
    // Predicated region
    $region42: #{language_model_forward.1} parent=1 // pred_check
      _
    $region43: #{language_model_forward.1} parent=1 // pred_check_branch
      %2011 = sbr.rel (0) target = $region45
    $region44: #{language_model_forward.1} parent=1 // pred_region
      %2012 = dma.done [#allocation9], 1024
    $region45: #{language_model_forward.1} parent=1 // pred_fallthru
      _
    %2013 = vsyncpa [#allocation3], 1
    %2014 = vsyncpa [#allocation6], 1
    %2015 = vsyncpa [#allocation4], 1
    %2016 = vsyncpa [#allocation9], 1

</llo_original>
